<compile_context>
chip_gen: v7x
topology: tpu7x:2x2x1
jax: 0.10.0
libtpu: 0.0.40
codegen_flags: <defaults>
</compile_context>

<pallas_src>
import jax
import jax.numpy as jnp
from jax.experimental import pallas as pl
from jax.experimental.pallas import tpu as pltpu


def _make_upblock_kernel(C, OC, HW, W2, eps=1e-5, slope=0.2):
    """One sample per grid step: 3x3 conv (9 tap matmuls + output rolls/masks)
    fused with InstanceNorm(affine) and LeakyReLU, on a lane-dense layout."""

    def kernel(x_ref, w_ref, m_ref, g_ref, b_ref, o_ref):
        # x_ref: (C, HW)    bf16  flattened nearest-upsampled sample
        # w_ref: (9, OC, C) bf16  per-tap conv weights, tap index t = kh*3 + kw
        # m_ref: (9, 1, HW) f32   {0,1} zero-padding boundary mask per tap
        # g_ref: (OC, 1)    f32   gamma
        # b_ref: (OC, 1)    f32   beta
        # o_ref: (OC, HW)   f32   NCHW-flattened output slab
        x = x_ref[...]
        acc = None
        t = 0
        for kh in range(3):
            for kw in range(3):
                # Matmul on the UNSHIFTED input; shift the f32 result instead
                # (identical math; rolls stay on f32 data, XLU slot).
                z = jnp.dot(w_ref[t], x, preferred_element_type=jnp.float32)
                d = (kh - 1) * W2 + (kw - 1)        # flat tap offset
                if d != 0:
                    # want z'[i] = z[i + d]  ->  np.roll-style shift of -d
                    z = pltpu.roll(z, (-d) % HW, 1)
                if kh != 1 or kw != 1:
                    z = z * m_ref[t]                # zero the padded-border taps
                acc = z if acc is None else acc + z
                t += 1

        # InstanceNorm (biased variance, single read pass) folded with the
        # affine params into one scale/shift, then LeakyReLU(0.2).
        inv_n = 1.0 / HW
        s = jnp.sum(acc, axis=1, keepdims=True)                      # (OC, 1)
        ss = jnp.sum(acc * acc, axis=1, keepdims=True)               # (OC, 1)
        mean = s * inv_n
        var = jnp.maximum(ss * inv_n - mean * mean, 0.0)             # guard cancellation
        scale = g_ref[...] * jax.lax.rsqrt(var + eps)
        shift = b_ref[...] - mean * scale
        y = acc * scale + shift
        o_ref[...] = jnp.where(y >= 0.0, y, slope * y)

    return kernel


def up_block_forward(x, w, b, gamma, beta, scale_factor=2, eps=1e-5, slope=0.2):
    """x: (N, C, H, W) float32 (PyTorch NCHW). Returns (N, OC, H*s, W*s) float32."""
    del b  # conv bias is exactly cancelled by InstanceNorm's mean subtraction
    N, C, H, W = x.shape
    OC, _, KH, KW = w.shape
    assert (KH, KW) == (3, 3), "kernel implements the 3x3 / stride 1 / pad 1 conv"
    s = scale_factor
    H2, W2 = H * s, W * s
    HW = H2 * W2

    # nearest-neighbour upsample via broadcast+reshape (no gather/repeat), bf16,
    # already flattened to the lane-dense (N, C, HW) layout (no transpose).
    x_up = jnp.broadcast_to(
        x.astype(jnp.bfloat16)[:, :, :, None, :, None], (N, C, H, s, W, s)
    ).reshape(N, C, HW)

    # per-tap conv weights, tap-major: w9[kh*3 + kw] = w[:, :, kh, kw]
    w9 = jnp.transpose(w, (2, 3, 0, 1)).reshape(KH * KW, OC, C).astype(jnp.bfloat16)

    # {0,1} masks realizing the conv zero padding for each tap offset.
    row = jax.lax.broadcasted_iota(jnp.int32, (H2, W2), 0)
    col = jax.lax.broadcasted_iota(jnp.int32, (H2, W2), 1)
    masks = []
    for kh in range(3):
        for kw in range(3):
            keep = jnp.ones((H2, W2), dtype=jnp.bool_)
            if kh == 0:
                keep = keep & (row >= 1)
            if kh == 2:
                keep = keep & (row <= H2 - 2)
            if kw == 0:
                keep = keep & (col >= 1)
            if kw == 2:
                keep = keep & (col <= W2 - 2)
            masks.append(keep.reshape(1, HW))
    mask9 = jnp.stack(masks, axis=0).astype(jnp.float32)            # (9, 1, HW)

    gamma2 = gamma.reshape(OC, 1).astype(jnp.float32)
    beta2 = beta.reshape(OC, 1).astype(jnp.float32)

    kernel = _make_upblock_kernel(C, OC, HW, W2, eps=eps, slope=slope)
    out_flat = pl.pallas_call(
        kernel,
        out_shape=jax.ShapeDtypeStruct((N, OC, HW), jnp.float32),
        grid_spec=pltpu.PrefetchScalarGridSpec(
            num_scalar_prefetch=0,
            grid=(N,),
            in_specs=[
                pl.BlockSpec((None, C, HW), lambda n: (n, 0, 0)),
                pl.BlockSpec((KH * KW, OC, C), lambda n: (0, 0, 0)),
                pl.BlockSpec((KH * KW, 1, HW), lambda n: (0, 0, 0)),
                pl.BlockSpec((OC, 1), lambda n: (0, 0)),
                pl.BlockSpec((OC, 1), lambda n: (0, 0)),
            ],
            out_specs=pl.BlockSpec((None, OC, HW), lambda n: (n, 0, 0)),
        ),
        compiler_params=pltpu.CompilerParams(
            dimension_semantics=("parallel",),
            vmem_limit_bytes=48 * 1024 * 1024,
        ),
    )(x_up, w9, mask9, gamma2, beta2)

    # (N, OC, HW) is already NCHW-flattened -> free reshape, no transpose.
    return out_flat.reshape(N, OC, H2, W2)


def _reference(x, w, b, gamma, beta, scale_factor=2, eps=1e-5, slope=0.2):
    """Pure-JAX reference: Upsample(nearest) + Conv2d + InstanceNorm2d + LeakyReLU."""
    x_up = jnp.repeat(jnp.repeat(x, scale_factor, axis=2), scale_factor, axis=3)
    y = jax.lax.conv_general_dilated(
        x_up, w, window_strides=(1, 1), padding=((1, 1), (1, 1)),
        dimension_numbers=("NCHW", "OIHW", "NCHW"))
    y = y + b.reshape(1, -1, 1, 1)
    mean = y.mean(axis=(2, 3), keepdims=True)
    var = y.var(axis=(2, 3), keepdims=True)  # biased, like PyTorch InstanceNorm
    y = (y - mean) / jnp.sqrt(var + eps)
    y = y * gamma.reshape(1, -1, 1, 1) + beta.reshape(1, -1, 1, 1)
    return jnp.where(y >= 0, y, slope * y)


if __name__ == "__main__":
    # Small deterministic setup consistent with the module:
    #   batch=2, in_channels=4, out_channels=8, spatial=16x16, kernel=3x3, scale=2
    N, C, OC, H, W, K, S = 2, 4, 8, 16, 16, 3, 2
    key = jax.random.PRNGKey(0)
    k1, k2, k3, k4, k5 = jax.random.split(key, 5)

    x = jax.random.normal(k1, (N, C, H, W), dtype=jnp.float32)
    fan_in = C * K * K
    bound = 1.0 / (fan_in ** 0.5)
    w = jax.random.uniform(k2, (OC, C, K, K), jnp.float32, -bound, bound)
    b = jax.random.uniform(k3, (OC,), jnp.float32, -bound, bound)
    gamma = 1.0 + 0.1 * jax.random.normal(k4, (OC,), jnp.float32)
    beta = 0.1 * jax.random.normal(k5, (OC,), jnp.float32)

    out = up_block_forward(x, w, b, gamma, beta, scale_factor=S)
    out = jax.block_until_ready(out)

    ref = _reference(x, w, b, gamma, beta, scale_factor=S)
    assert out.shape == (N, OC, H * S, W * S), out.shape
    max_err = float(jnp.max(jnp.abs(out - ref)))
    # bf16 matmul operands -> relaxed tolerance vs. the all-f32 reference.
    assert max_err < 5e-2, max_err

    print("KERNEL_OK")
</pallas_src>

<mosaic_0001>
module attributes {stable_mosaic.version = 11 : i64} {
  func.func @kernel(%arg0: i32, %arg1: memref<1x4x1024xbf16, #tpu.memory_space<vmem>>, %arg2: memref<9x8x4xbf16, #tpu.memory_space<vmem>>, %arg3: memref<9x1x1024xf32, #tpu.memory_space<vmem>>, %arg4: memref<8x1xf32, #tpu.memory_space<vmem>>, %arg5: memref<8x1xf32, #tpu.memory_space<vmem>>, %arg6: memref<1x8x1024xf32, #tpu.memory_space<vmem>>) attributes {dimension_semantics = [#tpu.dimension_semantics<parallel>], iteration_bounds = array<i64: 2>, scalar_prefetch = 0 : i64, scratch_operands = 0 : i64, tpu.core_type = #tpu.core_type<tc>, window_params = [{transform_indices = @transform_0, window_bounds = array<i64: 1, 4, 1024>}, {pipeline_mode = #tpu.pipeline_mode<synchronous>, transform_indices = @transform_1, window_bounds = array<i64: 9, 8, 4>}, {pipeline_mode = #tpu.pipeline_mode<synchronous>, transform_indices = @transform_2, window_bounds = array<i64: 9, 1, 1024>}, {pipeline_mode = #tpu.pipeline_mode<synchronous>, transform_indices = @transform_3, window_bounds = array<i64: 8, 1>}, {pipeline_mode = #tpu.pipeline_mode<synchronous>, transform_indices = @transform_4, window_bounds = array<i64: 8, 1>}, {transform_indices = @transform_5, window_bounds = array<i64: 1, 8, 1024>}]} {
    %c0 = arith.constant 0 : index
    %c0_0 = arith.constant 0 : index
    %c0_1 = arith.constant 0 : index
    %0 = vector.load %arg1[%c0, %c0_0, %c0_1] : memref<1x4x1024xbf16, #tpu.memory_space<vmem>>, vector<1x4x1024xbf16>
    %1 = vector.shape_cast %0 : vector<1x4x1024xbf16> to vector<4x1024xbf16>
    %c0_2 = arith.constant 0 : index
    %c0_3 = arith.constant 0 : index
    %c0_4 = arith.constant 0 : index
    %2 = vector.load %arg2[%c0_2, %c0_3, %c0_4] : memref<9x8x4xbf16, #tpu.memory_space<vmem>>, vector<1x8x4xbf16>
    %3 = vector.shape_cast %2 : vector<1x8x4xbf16> to vector<8x4xbf16>
    %cst = arith.constant dense<0.000000e+00> : vector<8x1024xf32>
    %4 = tpu.matmul %3, %1, %cst {dimension_numbers = #tpu.dot_dimension_numbers<[1], [0], [0], [1], [0, 0, 1, 1], [], []>} : vector<8x4xbf16>, vector<4x1024xbf16>, vector<8x1024xf32> -> vector<8x1024xf32>
    %c33_i32 = arith.constant 33 : i32
    %5 = tpu.dynamic_rotate %4 by %c33_i32 dim 1 : vector<8x1024xf32>, i32 -> vector<8x1024xf32>
    %c0_5 = arith.constant 0 : index
    %c0_6 = arith.constant 0 : index
    %c0_7 = arith.constant 0 : index
    %6 = vector.load %arg3[%c0_5, %c0_6, %c0_7] : memref<9x1x1024xf32, #tpu.memory_space<vmem>>, vector<1x1x1024xf32>
    %7 = vector.shape_cast %6 : vector<1x1x1024xf32> to vector<1x1024xf32>
    %8 = vector.broadcast %7 : vector<1x1024xf32> to vector<8x1024xf32>
    %9 = arith.mulf %5, %8 : vector<8x1024xf32>
    %c1 = arith.constant 1 : index
    %c0_8 = arith.constant 0 : index
    %c0_9 = arith.constant 0 : index
    %10 = vector.load %arg2[%c1, %c0_8, %c0_9] : memref<9x8x4xbf16, #tpu.memory_space<vmem>>, vector<1x8x4xbf16>
    %11 = vector.shape_cast %10 : vector<1x8x4xbf16> to vector<8x4xbf16>
    %cst_10 = arith.constant dense<0.000000e+00> : vector<8x1024xf32>
    %12 = tpu.matmul %11, %1, %cst_10 {dimension_numbers = #tpu.dot_dimension_numbers<[1], [0], [0], [1], [0, 0, 1, 1], [], []>} : vector<8x4xbf16>, vector<4x1024xbf16>, vector<8x1024xf32> -> vector<8x1024xf32>
    %c32_i32 = arith.constant 32 : i32
    %13 = tpu.dynamic_rotate %12 by %c32_i32 dim 1 : vector<8x1024xf32>, i32 -> vector<8x1024xf32>
    %c1_11 = arith.constant 1 : index
    %c0_12 = arith.constant 0 : index
    %c0_13 = arith.constant 0 : index
    %14 = vector.load %arg3[%c1_11, %c0_12, %c0_13] : memref<9x1x1024xf32, #tpu.memory_space<vmem>>, vector<1x1x1024xf32>
    %15 = vector.shape_cast %14 : vector<1x1x1024xf32> to vector<1x1024xf32>
    %16 = vector.broadcast %15 : vector<1x1024xf32> to vector<8x1024xf32>
    %17 = arith.mulf %13, %16 : vector<8x1024xf32>
    %18 = arith.addf %9, %17 : vector<8x1024xf32>
    %c2 = arith.constant 2 : index
    %c0_14 = arith.constant 0 : index
    %c0_15 = arith.constant 0 : index
    %19 = vector.load %arg2[%c2, %c0_14, %c0_15] : memref<9x8x4xbf16, #tpu.memory_space<vmem>>, vector<1x8x4xbf16>
    %20 = vector.shape_cast %19 : vector<1x8x4xbf16> to vector<8x4xbf16>
    %cst_16 = arith.constant dense<0.000000e+00> : vector<8x1024xf32>
    %21 = tpu.matmul %20, %1, %cst_16 {dimension_numbers = #tpu.dot_dimension_numbers<[1], [0], [0], [1], [0, 0, 1, 1], [], []>} : vector<8x4xbf16>, vector<4x1024xbf16>, vector<8x1024xf32> -> vector<8x1024xf32>
    %c31_i32 = arith.constant 31 : i32
    %22 = tpu.dynamic_rotate %21 by %c31_i32 dim 1 : vector<8x1024xf32>, i32 -> vector<8x1024xf32>
    %c2_17 = arith.constant 2 : index
    %c0_18 = arith.constant 0 : index
    %c0_19 = arith.constant 0 : index
    %23 = vector.load %arg3[%c2_17, %c0_18, %c0_19] : memref<9x1x1024xf32, #tpu.memory_space<vmem>>, vector<1x1x1024xf32>
    %24 = vector.shape_cast %23 : vector<1x1x1024xf32> to vector<1x1024xf32>
    %25 = vector.broadcast %24 : vector<1x1024xf32> to vector<8x1024xf32>
    %26 = arith.mulf %22, %25 : vector<8x1024xf32>
    %27 = arith.addf %18, %26 : vector<8x1024xf32>
    %c3 = arith.constant 3 : index
    %c0_20 = arith.constant 0 : index
    %c0_21 = arith.constant 0 : index
    %28 = vector.load %arg2[%c3, %c0_20, %c0_21] : memref<9x8x4xbf16, #tpu.memory_space<vmem>>, vector<1x8x4xbf16>
    %29 = vector.shape_cast %28 : vector<1x8x4xbf16> to vector<8x4xbf16>
    %cst_22 = arith.constant dense<0.000000e+00> : vector<8x1024xf32>
    %30 = tpu.matmul %29, %1, %cst_22 {dimension_numbers = #tpu.dot_dimension_numbers<[1], [0], [0], [1], [0, 0, 1, 1], [], []>} : vector<8x4xbf16>, vector<4x1024xbf16>, vector<8x1024xf32> -> vector<8x1024xf32>
    %c1_i32 = arith.constant 1 : i32
    %31 = tpu.dynamic_rotate %30 by %c1_i32 dim 1 : vector<8x1024xf32>, i32 -> vector<8x1024xf32>
    %c3_23 = arith.constant 3 : index
    %c0_24 = arith.constant 0 : index
    %c0_25 = arith.constant 0 : index
    %32 = vector.load %arg3[%c3_23, %c0_24, %c0_25] : memref<9x1x1024xf32, #tpu.memory_space<vmem>>, vector<1x1x1024xf32>
    %33 = vector.shape_cast %32 : vector<1x1x1024xf32> to vector<1x1024xf32>
    %34 = vector.broadcast %33 : vector<1x1024xf32> to vector<8x1024xf32>
    %35 = arith.mulf %31, %34 : vector<8x1024xf32>
    %36 = arith.addf %27, %35 : vector<8x1024xf32>
    %c4 = arith.constant 4 : index
    %c0_26 = arith.constant 0 : index
    %c0_27 = arith.constant 0 : index
    %37 = vector.load %arg2[%c4, %c0_26, %c0_27] : memref<9x8x4xbf16, #tpu.memory_space<vmem>>, vector<1x8x4xbf16>
    %38 = vector.shape_cast %37 : vector<1x8x4xbf16> to vector<8x4xbf16>
    %cst_28 = arith.constant dense<0.000000e+00> : vector<8x1024xf32>
    %39 = tpu.matmul %38, %1, %cst_28 {dimension_numbers = #tpu.dot_dimension_numbers<[1], [0], [0], [1], [0, 0, 1, 1], [], []>} : vector<8x4xbf16>, vector<4x1024xbf16>, vector<8x1024xf32> -> vector<8x1024xf32>
    %40 = arith.addf %36, %39 : vector<8x1024xf32>
    %c5 = arith.constant 5 : index
    %c0_29 = arith.constant 0 : index
    %c0_30 = arith.constant 0 : index
    %41 = vector.load %arg2[%c5, %c0_29, %c0_30] : memref<9x8x4xbf16, #tpu.memory_space<vmem>>, vector<1x8x4xbf16>
    %42 = vector.shape_cast %41 : vector<1x8x4xbf16> to vector<8x4xbf16>
    %cst_31 = arith.constant dense<0.000000e+00> : vector<8x1024xf32>
    %43 = tpu.matmul %42, %1, %cst_31 {dimension_numbers = #tpu.dot_dimension_numbers<[1], [0], [0], [1], [0, 0, 1, 1], [], []>} : vector<8x4xbf16>, vector<4x1024xbf16>, vector<8x1024xf32> -> vector<8x1024xf32>
    %c1023_i32 = arith.constant 1023 : i32
    %44 = tpu.dynamic_rotate %43 by %c1023_i32 dim 1 : vector<8x1024xf32>, i32 -> vector<8x1024xf32>
    %c5_32 = arith.constant 5 : index
    %c0_33 = arith.constant 0 : index
    %c0_34 = arith.constant 0 : index
    %45 = vector.load %arg3[%c5_32, %c0_33, %c0_34] : memref<9x1x1024xf32, #tpu.memory_space<vmem>>, vector<1x1x1024xf32>
    %46 = vector.shape_cast %45 : vector<1x1x1024xf32> to vector<1x1024xf32>
    %47 = vector.broadcast %46 : vector<1x1024xf32> to vector<8x1024xf32>
    %48 = arith.mulf %44, %47 : vector<8x1024xf32>
    %49 = arith.addf %40, %48 : vector<8x1024xf32>
    %c6 = arith.constant 6 : index
    %c0_35 = arith.constant 0 : index
    %c0_36 = arith.constant 0 : index
    %50 = vector.load %arg2[%c6, %c0_35, %c0_36] : memref<9x8x4xbf16, #tpu.memory_space<vmem>>, vector<1x8x4xbf16>
    %51 = vector.shape_cast %50 : vector<1x8x4xbf16> to vector<8x4xbf16>
    %cst_37 = arith.constant dense<0.000000e+00> : vector<8x1024xf32>
    %52 = tpu.matmul %51, %1, %cst_37 {dimension_numbers = #tpu.dot_dimension_numbers<[1], [0], [0], [1], [0, 0, 1, 1], [], []>} : vector<8x4xbf16>, vector<4x1024xbf16>, vector<8x1024xf32> -> vector<8x1024xf32>
    %c993_i32 = arith.constant 993 : i32
    %53 = tpu.dynamic_rotate %52 by %c993_i32 dim 1 : vector<8x1024xf32>, i32 -> vector<8x1024xf32>
    %c6_38 = arith.constant 6 : index
    %c0_39 = arith.constant 0 : index
    %c0_40 = arith.constant 0 : index
    %54 = vector.load %arg3[%c6_38, %c0_39, %c0_40] : memref<9x1x1024xf32, #tpu.memory_space<vmem>>, vector<1x1x1024xf32>
    %55 = vector.shape_cast %54 : vector<1x1x1024xf32> to vector<1x1024xf32>
    %56 = vector.broadcast %55 : vector<1x1024xf32> to vector<8x1024xf32>
    %57 = arith.mulf %53, %56 : vector<8x1024xf32>
    %58 = arith.addf %49, %57 : vector<8x1024xf32>
    %c7 = arith.constant 7 : index
    %c0_41 = arith.constant 0 : index
    %c0_42 = arith.constant 0 : index
    %59 = vector.load %arg2[%c7, %c0_41, %c0_42] : memref<9x8x4xbf16, #tpu.memory_space<vmem>>, vector<1x8x4xbf16>
    %60 = vector.shape_cast %59 : vector<1x8x4xbf16> to vector<8x4xbf16>
    %cst_43 = arith.constant dense<0.000000e+00> : vector<8x1024xf32>
    %61 = tpu.matmul %60, %1, %cst_43 {dimension_numbers = #tpu.dot_dimension_numbers<[1], [0], [0], [1], [0, 0, 1, 1], [], []>} : vector<8x4xbf16>, vector<4x1024xbf16>, vector<8x1024xf32> -> vector<8x1024xf32>
    %c992_i32 = arith.constant 992 : i32
    %62 = tpu.dynamic_rotate %61 by %c992_i32 dim 1 : vector<8x1024xf32>, i32 -> vector<8x1024xf32>
    %c7_44 = arith.constant 7 : index
    %c0_45 = arith.constant 0 : index
    %c0_46 = arith.constant 0 : index
    %63 = vector.load %arg3[%c7_44, %c0_45, %c0_46] : memref<9x1x1024xf32, #tpu.memory_space<vmem>>, vector<1x1x1024xf32>
    %64 = vector.shape_cast %63 : vector<1x1x1024xf32> to vector<1x1024xf32>
    %65 = vector.broadcast %64 : vector<1x1024xf32> to vector<8x1024xf32>
    %66 = arith.mulf %62, %65 : vector<8x1024xf32>
    %67 = arith.addf %58, %66 : vector<8x1024xf32>
    %c8 = arith.constant 8 : index
    %c0_47 = arith.constant 0 : index
    %c0_48 = arith.constant 0 : index
    %68 = vector.load %arg2[%c8, %c0_47, %c0_48] : memref<9x8x4xbf16, #tpu.memory_space<vmem>>, vector<1x8x4xbf16>
    %69 = vector.shape_cast %68 : vector<1x8x4xbf16> to vector<8x4xbf16>
    %cst_49 = arith.constant dense<0.000000e+00> : vector<8x1024xf32>
    %70 = tpu.matmul %69, %1, %cst_49 {dimension_numbers = #tpu.dot_dimension_numbers<[1], [0], [0], [1], [0, 0, 1, 1], [], []>} : vector<8x4xbf16>, vector<4x1024xbf16>, vector<8x1024xf32> -> vector<8x1024xf32>
    %c991_i32 = arith.constant 991 : i32
    %71 = tpu.dynamic_rotate %70 by %c991_i32 dim 1 : vector<8x1024xf32>, i32 -> vector<8x1024xf32>
    %c8_50 = arith.constant 8 : index
    %c0_51 = arith.constant 0 : index
    %c0_52 = arith.constant 0 : index
    %72 = vector.load %arg3[%c8_50, %c0_51, %c0_52] : memref<9x1x1024xf32, #tpu.memory_space<vmem>>, vector<1x1x1024xf32>
    %73 = vector.shape_cast %72 : vector<1x1x1024xf32> to vector<1x1024xf32>
    %74 = vector.broadcast %73 : vector<1x1024xf32> to vector<8x1024xf32>
    %75 = arith.mulf %71, %74 : vector<8x1024xf32>
    %76 = arith.addf %67, %75 : vector<8x1024xf32>
    %cst_53 = arith.constant dense<0.000000e+00> : vector<8xf32>
    %77 = vector.multi_reduction <add>, %76, %cst_53 [1] : vector<8x1024xf32> to vector<8xf32>
    %78 = vector.shape_cast %77 : vector<8xf32> to vector<8x1xf32>
    %79 = arith.mulf %76, %76 : vector<8x1024xf32>
    %cst_54 = arith.constant dense<0.000000e+00> : vector<8xf32>
    %80 = vector.multi_reduction <add>, %79, %cst_54 [1] : vector<8x1024xf32> to vector<8xf32>
    %81 = vector.shape_cast %80 : vector<8xf32> to vector<8x1xf32>
    %cst_55 = arith.constant 9.765625E-4 : f32
    %82 = vector.broadcast %cst_55 : f32 to vector<8x1xf32>
    %83 = arith.mulf %78, %82 : vector<8x1xf32>
    %cst_56 = arith.constant 9.765625E-4 : f32
    %84 = vector.broadcast %cst_56 : f32 to vector<8x1xf32>
    %85 = arith.mulf %81, %84 : vector<8x1xf32>
    %86 = arith.mulf %83, %83 : vector<8x1xf32>
    %87 = arith.subf %85, %86 : vector<8x1xf32>
    %cst_57 = arith.constant 0.000000e+00 : f32
    %88 = vector.broadcast %cst_57 : f32 to vector<8x1xf32>
    %89 = arith.maximumf %87, %88 : vector<8x1xf32>
    %c0_58 = arith.constant 0 : index
    %c0_59 = arith.constant 0 : index
    %90 = vector.load %arg4[%c0_58, %c0_59] : memref<8x1xf32, #tpu.memory_space<vmem>>, vector<8x1xf32>
    %cst_60 = arith.constant 9.99999974E-6 : f32
    %91 = vector.broadcast %cst_60 : f32 to vector<8x1xf32>
    %92 = arith.addf %89, %91 : vector<8x1xf32>
    %93 = math.rsqrt %92 : vector<8x1xf32>
    %94 = arith.mulf %90, %93 : vector<8x1xf32>
    %c0_61 = arith.constant 0 : index
    %c0_62 = arith.constant 0 : index
    %95 = vector.load %arg5[%c0_61, %c0_62] : memref<8x1xf32, #tpu.memory_space<vmem>>, vector<8x1xf32>
    %96 = arith.mulf %83, %94 : vector<8x1xf32>
    %97 = arith.subf %95, %96 : vector<8x1xf32>
    %98 = vector.broadcast %94 : vector<8x1xf32> to vector<8x1024xf32>
    %99 = arith.mulf %76, %98 : vector<8x1024xf32>
    %100 = vector.broadcast %97 : vector<8x1xf32> to vector<8x1024xf32>
    %101 = arith.addf %99, %100 : vector<8x1024xf32>
    %cst_63 = arith.constant 0.000000e+00 : f32
    %102 = vector.broadcast %cst_63 : f32 to vector<8x1024xf32>
    %103 = arith.cmpf oge, %101, %102 : vector<8x1024xf32>
    %cst_64 = arith.constant 2.000000e-01 : f32
    %104 = vector.broadcast %cst_64 : f32 to vector<8x1024xf32>
    %105 = arith.mulf %104, %101 : vector<8x1024xf32>
    %106 = arith.select %103, %101, %105 : vector<8x1024xi1>, vector<8x1024xf32>
    %c0_65 = arith.constant 0 : index
    %c0_66 = arith.constant 0 : index
    %c0_67 = arith.constant 0 : index
    %107 = vector.load %arg6[%c0_65, %c0_66, %c0_67] : memref<1x8x1024xf32, #tpu.memory_space<vmem>>, vector<1x8x1024xf32>
    %108 = vector.shape_cast %107 : vector<1x8x1024xf32> to vector<8x1024xf32>
    %109 = vector.shape_cast %106 : vector<8x1024xf32> to vector<1x8x1024xf32>
    tpu.vector_store %arg6[%c0_65, %c0_66, %c0_67], %109 {strides = array<i32>} : memref<1x8x1024xf32, #tpu.memory_space<vmem>>, vector<1x8x1024xf32>,
    return
  }
  func.func @transform_0(%arg0: i32) -> (i32, i32, i32) {
    %c0_i32 = arith.constant 0 : i32
    %c0_i32_0 = arith.constant 0 : i32
    %c0_i32_1 = arith.constant 0 : i32
    return %arg0, %c0_i32, %c0_i32_0 : i32, i32, i32
  }
  func.func @transform_1(%arg0: i32) -> (i32, i32, i32) {
    %c0_i32 = arith.constant 0 : i32
    %c0_i32_0 = arith.constant 0 : i32
    %c0_i32_1 = arith.constant 0 : i32
    %c0_i32_2 = arith.constant 0 : i32
    return %c0_i32, %c0_i32_0, %c0_i32_1 : i32, i32, i32
  }
  func.func @transform_2(%arg0: i32) -> (i32, i32, i32) {
    %c0_i32 = arith.constant 0 : i32
    %c0_i32_0 = arith.constant 0 : i32
    %c0_i32_1 = arith.constant 0 : i32
    %c0_i32_2 = arith.constant 0 : i32
    return %c0_i32, %c0_i32_0, %c0_i32_1 : i32, i32, i32
  }
  func.func @transform_3(%arg0: i32) -> (i32, i32) {
    %c0_i32 = arith.constant 0 : i32
    %c0_i32_0 = arith.constant 0 : i32
    %c0_i32_1 = arith.constant 0 : i32
    return %c0_i32, %c0_i32_0 : i32, i32
  }
  func.func @transform_4(%arg0: i32) -> (i32, i32) {
    %c0_i32 = arith.constant 0 : i32
    %c0_i32_0 = arith.constant 0 : i32
    %c0_i32_1 = arith.constant 0 : i32
    return %c0_i32, %c0_i32_0 : i32, i32
  }
  func.func @transform_5(%arg0: i32) -> (i32, i32, i32) {
    %c0_i32 = arith.constant 0 : i32
    %c0_i32_0 = arith.constant 0 : i32
    %c0_i32_1 = arith.constant 0 : i32
    return %arg0, %c0_i32, %c0_i32_0 : i32, i32, i32
  }
}

</mosaic_0001>

<llo_original>
// kernel: tpu_custom_call.1
$region0: #{tpu_custom_call.1}
  #allocation0 [shape = 'u32[]', space=smem, size = 0x4, offset = 0x4, fixed_abs, tag = 'smem constant byte address 0x4 - core index']
  #allocation1 [shape = 'u32[144,128]{1,0:T(1,128)}', space=vmem, size = 0x12000, scoped, tag = 'internal scratch']
  %s0 = inlined_call_operand.hbm [shape: bf16[2,4,1024], index: 0, kind: input, shape index: {}]
  %s1 = inlined_call_operand.vmem [shape: bf16[9,8,4], index: 1, kind: input, shape index: {}]
  %s2 = inlined_call_operand.vmem [shape: f32[9,1,1024], index: 2, kind: input, shape index: {}]
  %s3 = inlined_call_operand.vmem [shape: f32[8,1], index: 3, kind: input, shape index: {}]
  %s4 = inlined_call_operand.vmem [shape: f32[8,1], index: 4, kind: input, shape index: {}]
  %s5 = inlined_call_operand.hbm [shape: f32[2,8,1024], index: 5, kind: output, shape index: {}]
  %s6 = sld [smem:[#allocation0]]
  $region57: #{tpu_custom_call.1} parent=0
    _
  %s8 = ssub.s32 1, %s6
  %s9 = scalar_select 0, %s8, %s6
  $region1: #{tpu_custom_call.1} parent=0
    #allocation2 [shape = 'u8[16384]{0}', space=vmem, size = 0x4000, scoped, tag = 'input window, operand 0']
    #allocation3 [shape = 's32[2]{0}', space=sflag, size = 0x8, scoped, tag = 'scoped memory for tpu_custom_call.1']
    #allocation4 [shape = 's32[2]{0}', space=sflag, size = 0x8, scoped, tag = 'scoped memory for tpu_custom_call.1']
    #allocation5 [shape = 'u8[65536]{0}', space=vmem, size = 0x10000, scoped, tag = 'output window, operand 0']
    %10 = vsyncpa [#allocation3], 0
    %s11 = scalar_lea.sflag [#allocation3], 1
    %12 = vsyncpa %s11, 0
    %13 = vsyncpa [#allocation4], 0
    %s14 = scalar_lea.sflag [#allocation4], 1
    %15 = vsyncpa %s14, 0
    loop: start=0, step=1, limit=4
    $region2: #{tpu_custom_call.1} parent=1 // loop_pre_header
      _
    $region3: #{tpu_custom_call.1} parent=1 // loop_header
      %s17 = sphi 0, %s21
      %p18 = scmp.ge.s32.totalorder %s17, 4
      %s27 = sphi 0, %s29
      %s30 = sphi 0, %s27
      %s31 = sphi 0, %s30
      %s47 = sphi 0, %s31
      %s51 = sphi 0, %s51
      %s53 = sphi 0, %s51
      %s54 = sphi 0, %s53
      %s68 = sphi 0, %s54
      %s72 = sphi 0, %s72
      %s74 = sphi 0, %s72
      %s75 = sphi 0, %s74
      %s89 = sphi 0, %s75
      %s93 = sphi 0, %s93
      %s95 = sphi 0, %s93
      %s96 = sphi 0, %s95
      %s110 = sphi 0, %s96
      %s114 = sphi 0, %s114
      %s116 = sphi 0, %s114
      %s117 = sphi 0, %s116
      %s131 = sphi 0, %s117
      %s137 = sphi 0, %s139
      %s140 = sphi 0, %s137
      %s141 = sphi 0, %s140
      %s157 = sphi 0, %s141
    $region4: #{tpu_custom_call.1} parent=1 // loop_header_branch
      %20 = sbr.rel (%p18) target = $region8
    $region5: #{tpu_custom_call.1} parent=1 // loop_body
      %s22 = ssub.s32 %s17, 1
      %s23 = ssub.s32 %s17, 2
      %s24 = sadd.s32 %s17, 1
      %s25 = ssub.s32 %s17, %s24
      %p26 = scmp.eq.s32.totalorder %s25, 0
      %s28 = sadd.s32 %s27, 1
      %s29 = scalar_select %p26, %s27, %s28
      %p32 = pneg %p26
      %p33 = scmp.eq.s32.totalorder %s17, 1
      %p34 = por %p32, %p33
      %p35 = scmp.ne.s32.totalorder %s27, %s30
      %p36 = scmp.eq.s32.totalorder %s17, 0
      %p37 = por %p35, %p36
      %p38 = scmp.ne.s32.totalorder %s27, %s30
      %p39 = scmp.eq.s32.totalorder %s22, 1
      %p40 = por %p38, %p39
      %p41 = scmp.ne.s32.totalorder %s30, %s31
      %p42 = scmp.eq.s32.totalorder %s22, 0
      %p43 = por %p41, %p42
      %p44 = scmp.ne.s32.totalorder %s30, %s31
      %p45 = scmp.eq.s32.totalorder %s23, 1
      %p46 = por %p44, %p45
      %p48 = scmp.ne.s32.totalorder %s31, %s47
      %p49 = scmp.eq.s32.totalorder %s23, 0
      %p50 = por %p48, %p49
      %s52 = sadd.s32 %s51, 1
      %p55 = scmp.eq.s32.totalorder %s17, 1
      %p56 = scmp.ne.s32.totalorder %s51, %s53
      %p57 = scmp.eq.s32.totalorder %s17, 0
      %p58 = por %p56, %p57
      %p59 = scmp.ne.s32.totalorder %s51, %s53
      %p60 = scmp.eq.s32.totalorder %s22, 1
      %p61 = por %p59, %p60
      %p62 = scmp.ne.s32.totalorder %s53, %s54
      %p63 = scmp.eq.s32.totalorder %s22, 0
      %p64 = por %p62, %p63
      %p65 = scmp.ne.s32.totalorder %s53, %s54
      %p66 = scmp.eq.s32.totalorder %s23, 1
      %p67 = por %p65, %p66
      %p69 = scmp.ne.s32.totalorder %s54, %s68
      %p70 = scmp.eq.s32.totalorder %s23, 0
      %p71 = por %p69, %p70
      %s73 = sadd.s32 %s72, 1
      %p76 = scmp.eq.s32.totalorder %s17, 1
      %p77 = scmp.ne.s32.totalorder %s72, %s74
      %p78 = scmp.eq.s32.totalorder %s17, 0
      %p79 = por %p77, %p78
      %p80 = scmp.ne.s32.totalorder %s72, %s74
      %p81 = scmp.eq.s32.totalorder %s22, 1
      %p82 = por %p80, %p81
      %p83 = scmp.ne.s32.totalorder %s74, %s75
      %p84 = scmp.eq.s32.totalorder %s22, 0
      %p85 = por %p83, %p84
      %p86 = scmp.ne.s32.totalorder %s74, %s75
      %p87 = scmp.eq.s32.totalorder %s23, 1
      %p88 = por %p86, %p87
      %p90 = scmp.ne.s32.totalorder %s75, %s89
      %p91 = scmp.eq.s32.totalorder %s23, 0
      %p92 = por %p90, %p91
      %s94 = sadd.s32 %s93, 1
      %p97 = scmp.eq.s32.totalorder %s17, 1
      %p98 = scmp.ne.s32.totalorder %s93, %s95
      %p99 = scmp.eq.s32.totalorder %s17, 0
      %p100 = por %p98, %p99
      %p101 = scmp.ne.s32.totalorder %s93, %s95
      %p102 = scmp.eq.s32.totalorder %s22, 1
      %p103 = por %p101, %p102
      %p104 = scmp.ne.s32.totalorder %s95, %s96
      %p105 = scmp.eq.s32.totalorder %s22, 0
      %p106 = por %p104, %p105
      %p107 = scmp.ne.s32.totalorder %s95, %s96
      %p108 = scmp.eq.s32.totalorder %s23, 1
      %p109 = por %p107, %p108
      %p111 = scmp.ne.s32.totalorder %s96, %s110
      %p112 = scmp.eq.s32.totalorder %s23, 0
      %p113 = por %p111, %p112
      %s115 = sadd.s32 %s114, 1
      %p118 = scmp.eq.s32.totalorder %s17, 1
      %p119 = scmp.ne.s32.totalorder %s114, %s116
      %p120 = scmp.eq.s32.totalorder %s17, 0
      %p121 = por %p119, %p120
      %p122 = scmp.ne.s32.totalorder %s114, %s116
      %p123 = scmp.eq.s32.totalorder %s22, 1
      %p124 = por %p122, %p123
      %p125 = scmp.ne.s32.totalorder %s116, %s117
      %p126 = scmp.eq.s32.totalorder %s22, 0
      %p127 = por %p125, %p126
      %p128 = scmp.ne.s32.totalorder %s116, %s117
      %p129 = scmp.eq.s32.totalorder %s23, 1
      %p130 = por %p128, %p129
      %p132 = scmp.ne.s32.totalorder %s117, %s131
      %p133 = scmp.eq.s32.totalorder %s23, 0
      %p134 = por %p132, %p133
      %s135 = ssub.s32 %s17, %s24
      %p136 = scmp.eq.s32.totalorder %s135, 0
      %s138 = sadd.s32 %s137, 1
      %s139 = scalar_select %p136, %s137, %s138
      %p142 = pneg %p136
      %p143 = scmp.eq.s32.totalorder %s17, 1
      %p144 = por %p142, %p143
      %p145 = scmp.ne.s32.totalorder %s137, %s140
      %p146 = scmp.eq.s32.totalorder %s17, 0
      %p147 = por %p145, %p146
      %p148 = scmp.ne.s32.totalorder %s137, %s140
      %p149 = scmp.eq.s32.totalorder %s22, 1
      %p150 = por %p148, %p149
      %p151 = scmp.ne.s32.totalorder %s140, %s141
      %p152 = scmp.eq.s32.totalorder %s22, 0
      %p153 = por %p151, %p152
      %p154 = scmp.ne.s32.totalorder %s140, %s141
      %p155 = scmp.eq.s32.totalorder %s23, 1
      %p156 = por %p154, %p155
      %p158 = scmp.ne.s32.totalorder %s141, %s157
      %p159 = scmp.eq.s32.totalorder %s23, 0
      %p160 = por %p158, %p159
      %p161 = scmp.le.s32.totalorder 1, %s17
      %p162 = scmp.lt.s32.totalorder %s17, 3
      %p163 = pnand %p161, %p162
      %p164 = pneg %p163
      // Predicated region
      $region9: #{tpu_custom_call.1} parent=5 // pred_check
        _
      $region10: #{tpu_custom_call.1} parent=5 // pred_check_branch
        %166 = sbr.rel (%p163) target = $region12
      $region11: #{tpu_custom_call.1} parent=5 // pred_region
        %s167 = ssub.s32 %s17, 1
        // Predicated region
        $region13: #{tpu_custom_call.1} parent=11 // pred_check
          %p168 = pneg %p64
        $region14: #{tpu_custom_call.1} parent=11 // pred_check_branch
          %170 = sbr.rel (%p168) target = $region16
        $region15: #{tpu_custom_call.1} parent=11 // pred_region
          _
        $region16: #{tpu_custom_call.1} parent=11 // pred_fallthru
          _
        // Predicated region
        $region17: #{tpu_custom_call.1} parent=11 // pred_check
          %p171 = pneg %p85
        $region18: #{tpu_custom_call.1} parent=11 // pred_check_branch
          %173 = sbr.rel (%p171) target = $region20
        $region19: #{tpu_custom_call.1} parent=11 // pred_region
          _
        $region20: #{tpu_custom_call.1} parent=11 // pred_fallthru
          _
        // Predicated region
        $region21: #{tpu_custom_call.1} parent=11 // pred_check
          %p174 = pneg %p106
        $region22: #{tpu_custom_call.1} parent=11 // pred_check_branch
          %176 = sbr.rel (%p174) target = $region24
        $region23: #{tpu_custom_call.1} parent=11 // pred_region
          _
        $region24: #{tpu_custom_call.1} parent=11 // pred_fallthru
          _
        // Predicated region
        $region25: #{tpu_custom_call.1} parent=11 // pred_check
          %p177 = pneg %p127
        $region26: #{tpu_custom_call.1} parent=11 // pred_check_branch
          %179 = sbr.rel (%p177) target = $region28
        $region27: #{tpu_custom_call.1} parent=11 // pred_region
          _
        $region28: #{tpu_custom_call.1} parent=11 // pred_fallthru
          _
      $region12: #{tpu_custom_call.1} parent=5 // pred_fallthru
        _
      %p180 = scmp.lt.s32.totalorder %s17, 2
      // Predicated region
      $region29: #{tpu_custom_call.1} parent=5 // pred_check
        %p181 = pneg %p180
      $region30: #{tpu_custom_call.1} parent=5 // pred_check_branch
        %183 = sbr.rel (%p181) target = $region32
      $region31: #{tpu_custom_call.1} parent=5 // pred_region
        // Predicated region
        $region33: #{tpu_custom_call.1} parent=31 // pred_check
          %p184 = pneg %p37
        $region34: #{tpu_custom_call.1} parent=31 // pred_check_branch
          %186 = sbr.rel (%p184) target = $region36
        $region35: #{tpu_custom_call.1} parent=31 // pred_region
          %s187 = sand.u32 %s27, 1
          %s188 = scalar_lea.sflag [#allocation3], %s187
          %s189 = sand.u32 %s27, 1
          %s190 = smul.addr %s189, 16
          %s191 = scalar_lea.vmem [#allocation2], %s190
          %s193 = ssub.s32 256, 256
          %194 = vsyncadd %s188, %s193
          %s195 = smul.addr %s17, 8
          %s196 = smul.addr %s195, 32
          %s197 = scalar_lea.hbm %s0, %s196
          %s199 = sshll.u32 %s191, 4
          %s200 = int_to_ptr.vmem [resolvable:$true] %s199
          %202 = dma.hbm_to_vmem [thread:$0]  %s197, 256, %s200, %s188
        $region36: #{tpu_custom_call.1} parent=31 // pred_fallthru
          _
      $region32: #{tpu_custom_call.1} parent=5 // pred_fallthru
        _
      %p203 = scmp.le.s32.totalorder 1, %s17
      %p204 = scmp.lt.s32.totalorder %s17, 3
      %p205 = pnand %p203, %p204
      %p206 = pneg %p205
      // Predicated region
      $region37: #{tpu_custom_call.1} parent=5 // pred_check
        _
      $region38: #{tpu_custom_call.1} parent=5 // pred_check_branch
        %208 = sbr.rel (%p205) target = $region40
      $region39: #{tpu_custom_call.1} parent=5 // pred_region
        %s209 = ssub.s32 %s17, 1
        %s210 = sand.u32 %s30, 1
        %s211 = scalar_lea.sflag [#allocation3], %s210
        %s212 = sand.u32 %s30, 1
        %s213 = smul.addr %s212, 16
        %s214 = scalar_lea.vmem [#allocation2], %s213
        // Predicated region
        $region41: #{tpu_custom_call.1} parent=39 // pred_check
          %p215 = pneg %p43
        $region42: #{tpu_custom_call.1} parent=39 // pred_check_branch
          %217 = sbr.rel (%p215) target = $region44
        $region43: #{tpu_custom_call.1} parent=39 // pred_region
          %218 = dma.done %s211, 256
        $region44: #{tpu_custom_call.1} parent=39 // pred_fallthru
          _
        %s219 = sand.u32 %s30, 1
        %s220 = scalar_lea.sflag [#allocation3], %s219
        %s221 = sand.u32 %s30, 1
        %s222 = smul.addr %s221, 16
        %s223 = scalar_lea.vmem [#allocation2], %s222
        %p224 = pneg %p43
        %p225 = pneg %p40
        %p226 = pneg %p64
        %p227 = pneg %p61
        %p228 = pneg %p85
        %p229 = pneg %p82
        %p230 = pneg %p106
        %p231 = pneg %p103
        %p232 = pneg %p127
        %p233 = pneg %p124
        %p234 = pneg %p153
        %p235 = pneg %p150
        %s236 = sand.u32 %s140, 1
        %s237 = scalar_lea.sflag [#allocation4], %s236
        %s238 = sand.u32 %s140, 1
        %s239 = smul.addr %s238, 64
        %s240 = scalar_lea.vmem [#allocation5], %s239
        %v242 = vld [vmem:[%s214] sm:$0xff]
        %v243 = vld [vmem:[%s214 + $0x8] sm:$0xff]
        %v244 = vld [vmem:[%s1] sm:$0xf]
        %v247 = vcombine.high %v242, %v242
        %v249 = vunpack.c.l.s4 1983009808
        %v250 = vunpack.c.0.s8 %v249
        %v251 = vlaneseq
        %v252 = vshrl.u32 %v251, 7
        %v253 = vsub.s32 %v250, %v252
        %v254 = vrot.slane %v242, %v253
        %v256 = vunpack.c.l.s4 1983009808
        %v257 = vunpack.c.0.s8 %v256
        %v258 = vlaneseq
        %v259 = vshrl.u32 %v258, 7
        %v260 = vsub.s32 %v257, %v259
        %v261 = vrot.slane %v247, %v260
        %v262 = vcombine.high %v254, %v254
        %v263 = vcombine.high %v261, %v261
        %v264 = vcombine.high %v243, %v243
        %v266 = vunpack.c.l.s4 1983009808
        %v267 = vunpack.c.0.s8 %v266
        %v268 = vlaneseq
        %v269 = vshrl.u32 %v268, 7
        %v270 = vsub.s32 %v267, %v269
        %v271 = vrot.slane %v243, %v270
        %v273 = vunpack.c.l.s4 1983009808
        %v274 = vunpack.c.0.s8 %v273
        %v275 = vlaneseq
        %v276 = vshrl.u32 %v275, 7
        %v277 = vsub.s32 %v274, %v276
        %v278 = vrot.slane %v264, %v277
        %v279 = vcombine.high %v271, %v271
        %v280 = vcombine.high %v278, %v278
        %vm281 = vcmask 31744
        %v283 = vsel %vm281, %v244, 0
        %vm285 = vcmask 1041408
        %v287 = vsel %vm285, %v254, 0
        %v290 = vsel %vm285, %v262, 0
        %v293 = vsel %vm285, %v261, 0
        %v296 = vsel %vm285, %v263, 0
        %v299 = vsel %vm285, %v271, 0
        %v302 = vsel %vm285, %v279, 0
        %v305 = vsel %vm285, %v278, 0
        %v308 = vsel %vm285, %v280, 0
        %310 = vmatprep.subr.bf16.mxu0 %v290
        %311 = vmatpush1.bf16.msra.mxu0 %v287
        %312 = vmatprep.subr.bf16.mxu0 0
        %313 = vmatpush1.bf16.msra.mxu0 0
        %314 = vmatprep.subr.bf16.mxu0 0
        %315 = vmatpush1.bf16.msra.mxu0 0
        %316 = vmatprep.subr.bf16.mxu0 0
        %317 = vmatpush1.bf16.msra.mxu0 0
        %318 = vmatprep.subr.bf16.mxu0 0
        %319 = vmatpush1.bf16.msra.mxu0 0
        %320 = vmatprep.subr.bf16.mxu0 0
        %321 = vmatpush1.bf16.msra.mxu0 0
        %322 = vmatprep.subr.bf16.mxu0 0
        %323 = vmatpush1.bf16.msra.mxu0 0
        %324 = vmatprep.subr.bf16.mxu0 0
        %325 = vmatpush1.bf16.msra.mxu0 0
        %326 = vmatprep.subr.bf16.mxu0 0
        %327 = vmatpush1.bf16.msra.mxu0 0
        %328 = vmatprep.subr.bf16.mxu0 0
        %329 = vmatpush1.bf16.msra.mxu0 0
        %330 = vmatprep.subr.bf16.mxu0 0
        %331 = vmatpush1.bf16.msra.mxu0 0
        %332 = vmatprep.subr.bf16.mxu0 0
        %333 = vmatpush1.bf16.msra.mxu0 0
        %334 = vmatprep.subr.bf16.mxu0 0
        %335 = vmatpush1.bf16.msra.mxu0 0
        %336 = vmatprep.subr.bf16.mxu0 0
        %337 = vmatpush1.bf16.msra.mxu0 0
        %338 = vmatprep.subr.bf16.mxu0 0
        %339 = vmatpush1.bf16.msra.mxu0 0
        %340 = vmatprep.subr.bf16.mxu0 0
        %341 = vmatpush1.bf16.msra.mxu0 0
        %342 = vmatprep.mubr.bf16.mxu0 0
        %343 = vmatmul.mubr.bf16.gmra.mrb[0].mxu0 %v283
        %v344 = vpop.f32.mrb[0].mxu0
        %v345 = vadd.f32 0.0, %v344
        %v346 = vpop.f32.mrb[0].mxu0
        %v347 = vadd.f32 0.0, %v346
        %v348 = vpop.f32.mrb[0].mxu0
        %v349 = vpop.f32.mrb[0].mxu0
        %350 = vdwg.mxu0
        %351 = vmatprep.subr.bf16.mxu0 %v296
        %352 = vmatpush1.bf16.msra.mxu0 %v293
        %353 = vmatprep.subr.bf16.mxu0 0
        %354 = vmatpush1.bf16.msra.mxu0 0
        %355 = vmatprep.subr.bf16.mxu0 0
        %356 = vmatpush1.bf16.msra.mxu0 0
        %357 = vmatprep.subr.bf16.mxu0 0
        %358 = vmatpush1.bf16.msra.mxu0 0
        %359 = vmatprep.subr.bf16.mxu0 0
        %360 = vmatpush1.bf16.msra.mxu0 0
        %361 = vmatprep.subr.bf16.mxu0 0
        %362 = vmatpush1.bf16.msra.mxu0 0
        %363 = vmatprep.subr.bf16.mxu0 0
        %364 = vmatpush1.bf16.msra.mxu0 0
        %365 = vmatprep.subr.bf16.mxu0 0
        %366 = vmatpush1.bf16.msra.mxu0 0
        %367 = vmatprep.subr.bf16.mxu0 0
        %368 = vmatpush1.bf16.msra.mxu0 0
        %369 = vmatprep.subr.bf16.mxu0 0
        %370 = vmatpush1.bf16.msra.mxu0 0
        %371 = vmatprep.subr.bf16.mxu0 0
        %372 = vmatpush1.bf16.msra.mxu0 0
        %373 = vmatprep.subr.bf16.mxu0 0
        %374 = vmatpush1.bf16.msra.mxu0 0
        %375 = vmatprep.subr.bf16.mxu0 0
        %376 = vmatpush1.bf16.msra.mxu0 0
        %377 = vmatprep.subr.bf16.mxu0 0
        %378 = vmatpush1.bf16.msra.mxu0 0
        %379 = vmatprep.subr.bf16.mxu0 0
        %380 = vmatpush1.bf16.msra.mxu0 0
        %381 = vmatprep.subr.bf16.mxu0 0
        %382 = vmatpush1.bf16.msra.mxu0 0
        %383 = vmatprep.mubr.bf16.mxu0 0
        %384 = vmatmul.mubr.bf16.gmra.mrb[0].mxu0 %v283
        %v385 = vpop.f32.mrb[0].mxu0
        %v386 = vadd.f32 0.0, %v385
        %v387 = vpop.f32.mrb[0].mxu0
        %v388 = vadd.f32 0.0, %v387
        %v389 = vpop.f32.mrb[0].mxu0
        %v390 = vpop.f32.mrb[0].mxu0
        %391 = vdwg.mxu0
        %392 = vmatprep.subr.bf16.mxu0 %v302
        %393 = vmatpush1.bf16.msra.mxu0 %v299
        %394 = vmatprep.subr.bf16.mxu0 0
        %395 = vmatpush1.bf16.msra.mxu0 0
        %396 = vmatprep.subr.bf16.mxu0 0
        %397 = vmatpush1.bf16.msra.mxu0 0
        %398 = vmatprep.subr.bf16.mxu0 0
        %399 = vmatpush1.bf16.msra.mxu0 0
        %400 = vmatprep.subr.bf16.mxu0 0
        %401 = vmatpush1.bf16.msra.mxu0 0
        %402 = vmatprep.subr.bf16.mxu0 0
        %403 = vmatpush1.bf16.msra.mxu0 0
        %404 = vmatprep.subr.bf16.mxu0 0
        %405 = vmatpush1.bf16.msra.mxu0 0
        %406 = vmatprep.subr.bf16.mxu0 0
        %407 = vmatpush1.bf16.msra.mxu0 0
        %408 = vmatprep.subr.bf16.mxu0 0
        %409 = vmatpush1.bf16.msra.mxu0 0
        %410 = vmatprep.subr.bf16.mxu0 0
        %411 = vmatpush1.bf16.msra.mxu0 0
        %412 = vmatprep.subr.bf16.mxu0 0
        %413 = vmatpush1.bf16.msra.mxu0 0
        %414 = vmatprep.subr.bf16.mxu0 0
        %415 = vmatpush1.bf16.msra.mxu0 0
        %416 = vmatprep.subr.bf16.mxu0 0
        %417 = vmatpush1.bf16.msra.mxu0 0
        %418 = vmatprep.subr.bf16.mxu0 0
        %419 = vmatpush1.bf16.msra.mxu0 0
        %420 = vmatprep.subr.bf16.mxu0 0
        %421 = vmatpush1.bf16.msra.mxu0 0
        %422 = vmatprep.subr.bf16.mxu0 0
        %423 = vmatpush1.bf16.msra.mxu0 0
        %424 = vmatprep.mubr.bf16.mxu0 0
        %425 = vmatmul.mubr.bf16.gmra.mrb[0].mxu0 %v283
        %v426 = vpop.f32.mrb[0].mxu0
        %v427 = vadd.f32 0.0, %v426
        %v428 = vpop.f32.mrb[0].mxu0
        %v429 = vadd.f32 0.0, %v428
        %v430 = vpop.f32.mrb[0].mxu0
        %v431 = vpop.f32.mrb[0].mxu0
        %432 = vdwg.mxu0
        %433 = vmatprep.subr.bf16.mxu0 %v308
        %434 = vmatpush1.bf16.msra.mxu0 %v305
        %435 = vmatprep.subr.bf16.mxu0 0
        %436 = vmatpush1.bf16.msra.mxu0 0
        %437 = vmatprep.subr.bf16.mxu0 0
        %438 = vmatpush1.bf16.msra.mxu0 0
        %439 = vmatprep.subr.bf16.mxu0 0
        %440 = vmatpush1.bf16.msra.mxu0 0
        %441 = vmatprep.subr.bf16.mxu0 0
        %442 = vmatpush1.bf16.msra.mxu0 0
        %443 = vmatprep.subr.bf16.mxu0 0
        %444 = vmatpush1.bf16.msra.mxu0 0
        %445 = vmatprep.subr.bf16.mxu0 0
        %446 = vmatpush1.bf16.msra.mxu0 0
        %447 = vmatprep.subr.bf16.mxu0 0
        %448 = vmatpush1.bf16.msra.mxu0 0
        %449 = vmatprep.subr.bf16.mxu0 0
        %450 = vmatpush1.bf16.msra.mxu0 0
        %451 = vmatprep.subr.bf16.mxu0 0
        %452 = vmatpush1.bf16.msra.mxu0 0
        %453 = vmatprep.subr.bf16.mxu0 0
        %454 = vmatpush1.bf16.msra.mxu0 0
        %455 = vmatprep.subr.bf16.mxu0 0
        %456 = vmatpush1.bf16.msra.mxu0 0
        %457 = vmatprep.subr.bf16.mxu0 0
        %458 = vmatpush1.bf16.msra.mxu0 0
        %459 = vmatprep.subr.bf16.mxu0 0
        %460 = vmatpush1.bf16.msra.mxu0 0
        %461 = vmatprep.subr.bf16.mxu0 0
        %462 = vmatpush1.bf16.msra.mxu0 0
        %463 = vmatprep.subr.bf16.mxu0 0
        %464 = vmatpush1.bf16.msra.mxu0 0
        %465 = vmatprep.mubr.bf16.mxu0 0
        %466 = vmatmul.mubr.bf16.gmra.mrb[0].mxu0 %v283
        %v467 = vpop.f32.mrb[0].mxu0
        %v468 = vadd.f32 0.0, %v467
        %v469 = vpop.f32.mrb[0].mxu0
        %v470 = vadd.f32 0.0, %v469
        %v471 = vpop.f32.mrb[0].mxu0
        %v472 = vpop.f32.mrb[0].mxu0
        %473 = vdwg.mxu0
        %474 = vrot.lane.b32.xlu0 %v345, 33
        %v475 = vpop.permute.xlu0 %474
        %476 = vrot.lane.b32.xlu0 %v347, 33
        %v477 = vpop.permute.xlu0 %476
        %478 = vrot.lane.b32.xlu0 %v386, 33
        %v479 = vpop.permute.xlu0 %478
        %480 = vrot.lane.b32.xlu0 %v388, 33
        %v481 = vpop.permute.xlu0 %480
        %482 = vrot.lane.b32.xlu0 %v427, 33
        %v483 = vpop.permute.xlu0 %482
        %484 = vrot.lane.b32.xlu0 %v429, 33
        %v485 = vpop.permute.xlu0 %484
        %486 = vrot.lane.b32.xlu0 %v468, 33
        %v487 = vpop.permute.xlu0 %486
        %488 = vrot.lane.b32.xlu0 %v470, 33
        %v489 = vpop.permute.xlu0 %488
        %v490 = vlaneseq
        %v491 = vand.u32 %v490, 127
        %vm492 = vcmp.lt.s32.totalorder %v491, 33
        %v493 = vsel %vm492, %v487, %v489
        %v494 = vsel %vm492, %v485, %v487
        %v495 = vsel %vm492, %v483, %v485
        %v496 = vsel %vm492, %v481, %v483
        %v497 = vsel %vm492, %v479, %v481
        %v498 = vsel %vm492, %v477, %v479
        %v499 = vsel %vm492, %v475, %v477
        %v500 = vsel %vm492, %v489, %v475
        %v501 = vld [vmem:[%s2] sm:$0xff]
        %v503 = vlaneseq
        %v504 = vshrl.u32 %v503, 7
        %v505 = vsub.s32 0, %v504
        %v506 = vrot.slane %v501, %v505
        %v507 = vlaneseq
        %v508 = vshrl.u32 %v507, 7
        %v509 = vsub.s32 1, %v508
        %v510 = vrot.slane %v501, %v509
        %v511 = vlaneseq
        %v512 = vshrl.u32 %v511, 7
        %v513 = vsub.s32 2, %v512
        %v514 = vrot.slane %v501, %v513
        %v515 = vlaneseq
        %v516 = vshrl.u32 %v515, 7
        %v517 = vsub.s32 3, %v516
        %v518 = vrot.slane %v501, %v517
        %v519 = vlaneseq
        %v520 = vshrl.u32 %v519, 7
        %v521 = vsub.s32 4, %v520
        %v522 = vrot.slane %v501, %v521
        %v523 = vlaneseq
        %v524 = vshrl.u32 %v523, 7
        %v525 = vsub.s32 5, %v524
        %v526 = vrot.slane %v501, %v525
        %v527 = vlaneseq
        %v528 = vshrl.u32 %v527, 7
        %v529 = vsub.s32 6, %v528
        %v530 = vrot.slane %v501, %v529
        %v531 = vlaneseq
        %v532 = vshrl.u32 %v531, 7
        %v533 = vsub.s32 7, %v532
        %v534 = vrot.slane %v501, %v533
        %v543 = vmul.f32 %v500, %v506
        %v544 = vmul.f32 %v499, %v510
        %v545 = vmul.f32 %v498, %v514
        %v546 = vmul.f32 %v497, %v518
        %v547 = vmul.f32 %v496, %v522
        %v548 = vmul.f32 %v495, %v526
        %v549 = vmul.f32 %v494, %v530
        %v550 = vmul.f32 %v493, %v534
        %s551 = scalar_lea.vmem %s1, 4
        %v552 = vld [vmem:[%s551] sm:$0xf]
        %v554 = vsel %vm281, %v552, 0
        %556 = vmatprep.subr.bf16.mxu0 %v290
        %557 = vmatpush1.bf16.msra.mxu0 %v287
        %558 = vmatprep.subr.bf16.mxu0 0
        %559 = vmatpush1.bf16.msra.mxu0 0
        %560 = vmatprep.subr.bf16.mxu0 0
        %561 = vmatpush1.bf16.msra.mxu0 0
        %562 = vmatprep.subr.bf16.mxu0 0
        %563 = vmatpush1.bf16.msra.mxu0 0
        %564 = vmatprep.subr.bf16.mxu0 0
        %565 = vmatpush1.bf16.msra.mxu0 0
        %566 = vmatprep.subr.bf16.mxu0 0
        %567 = vmatpush1.bf16.msra.mxu0 0
        %568 = vmatprep.subr.bf16.mxu0 0
        %569 = vmatpush1.bf16.msra.mxu0 0
        %570 = vmatprep.subr.bf16.mxu0 0
        %571 = vmatpush1.bf16.msra.mxu0 0
        %572 = vmatprep.subr.bf16.mxu0 0
        %573 = vmatpush1.bf16.msra.mxu0 0
        %574 = vmatprep.subr.bf16.mxu0 0
        %575 = vmatpush1.bf16.msra.mxu0 0
        %576 = vmatprep.subr.bf16.mxu0 0
        %577 = vmatpush1.bf16.msra.mxu0 0
        %578 = vmatprep.subr.bf16.mxu0 0
        %579 = vmatpush1.bf16.msra.mxu0 0
        %580 = vmatprep.subr.bf16.mxu0 0
        %581 = vmatpush1.bf16.msra.mxu0 0
        %582 = vmatprep.subr.bf16.mxu0 0
        %583 = vmatpush1.bf16.msra.mxu0 0
        %584 = vmatprep.subr.bf16.mxu0 0
        %585 = vmatpush1.bf16.msra.mxu0 0
        %586 = vmatprep.subr.bf16.mxu0 0
        %587 = vmatpush1.bf16.msra.mxu0 0
        %588 = vmatprep.mubr.bf16.mxu0 0
        %589 = vmatmul.mubr.bf16.gmra.mrb[0].mxu0 %v554
        %v590 = vpop.f32.mrb[0].mxu0
        %v591 = vadd.f32 0.0, %v590
        %v592 = vpop.f32.mrb[0].mxu0
        %v593 = vadd.f32 0.0, %v592
        %v594 = vpop.f32.mrb[0].mxu0
        %v595 = vpop.f32.mrb[0].mxu0
        %596 = vdwg.mxu0
        %597 = vmatprep.subr.bf16.mxu0 %v296
        %598 = vmatpush1.bf16.msra.mxu0 %v293
        %599 = vmatprep.subr.bf16.mxu0 0
        %600 = vmatpush1.bf16.msra.mxu0 0
        %601 = vmatprep.subr.bf16.mxu0 0
        %602 = vmatpush1.bf16.msra.mxu0 0
        %603 = vmatprep.subr.bf16.mxu0 0
        %604 = vmatpush1.bf16.msra.mxu0 0
        %605 = vmatprep.subr.bf16.mxu0 0
        %606 = vmatpush1.bf16.msra.mxu0 0
        %607 = vmatprep.subr.bf16.mxu0 0
        %608 = vmatpush1.bf16.msra.mxu0 0
        %609 = vmatprep.subr.bf16.mxu0 0
        %610 = vmatpush1.bf16.msra.mxu0 0
        %611 = vmatprep.subr.bf16.mxu0 0
        %612 = vmatpush1.bf16.msra.mxu0 0
        %613 = vmatprep.subr.bf16.mxu0 0
        %614 = vmatpush1.bf16.msra.mxu0 0
        %615 = vmatprep.subr.bf16.mxu0 0
        %616 = vmatpush1.bf16.msra.mxu0 0
        %617 = vmatprep.subr.bf16.mxu0 0
        %618 = vmatpush1.bf16.msra.mxu0 0
        %619 = vmatprep.subr.bf16.mxu0 0
        %620 = vmatpush1.bf16.msra.mxu0 0
        %621 = vmatprep.subr.bf16.mxu0 0
        %622 = vmatpush1.bf16.msra.mxu0 0
        %623 = vmatprep.subr.bf16.mxu0 0
        %624 = vmatpush1.bf16.msra.mxu0 0
        %625 = vmatprep.subr.bf16.mxu0 0
        %626 = vmatpush1.bf16.msra.mxu0 0
        %627 = vmatprep.subr.bf16.mxu0 0
        %628 = vmatpush1.bf16.msra.mxu0 0
        %629 = vmatprep.mubr.bf16.mxu0 0
        %630 = vmatmul.mubr.bf16.gmra.mrb[0].mxu0 %v554
        %v631 = vpop.f32.mrb[0].mxu0
        %v632 = vadd.f32 0.0, %v631
        %v633 = vpop.f32.mrb[0].mxu0
        %v634 = vadd.f32 0.0, %v633
        %v635 = vpop.f32.mrb[0].mxu0
        %v636 = vpop.f32.mrb[0].mxu0
        %637 = vdwg.mxu0
        %638 = vmatprep.subr.bf16.mxu0 %v302
        %639 = vmatpush1.bf16.msra.mxu0 %v299
        %640 = vmatprep.subr.bf16.mxu0 0
        %641 = vmatpush1.bf16.msra.mxu0 0
        %642 = vmatprep.subr.bf16.mxu0 0
        %643 = vmatpush1.bf16.msra.mxu0 0
        %644 = vmatprep.subr.bf16.mxu0 0
        %645 = vmatpush1.bf16.msra.mxu0 0
        %646 = vmatprep.subr.bf16.mxu0 0
        %647 = vmatpush1.bf16.msra.mxu0 0
        %648 = vmatprep.subr.bf16.mxu0 0
        %649 = vmatpush1.bf16.msra.mxu0 0
        %650 = vmatprep.subr.bf16.mxu0 0
        %651 = vmatpush1.bf16.msra.mxu0 0
        %652 = vmatprep.subr.bf16.mxu0 0
        %653 = vmatpush1.bf16.msra.mxu0 0
        %654 = vmatprep.subr.bf16.mxu0 0
        %655 = vmatpush1.bf16.msra.mxu0 0
        %656 = vmatprep.subr.bf16.mxu0 0
        %657 = vmatpush1.bf16.msra.mxu0 0
        %658 = vmatprep.subr.bf16.mxu0 0
        %659 = vmatpush1.bf16.msra.mxu0 0
        %660 = vmatprep.subr.bf16.mxu0 0
        %661 = vmatpush1.bf16.msra.mxu0 0
        %662 = vmatprep.subr.bf16.mxu0 0
        %663 = vmatpush1.bf16.msra.mxu0 0
        %664 = vmatprep.subr.bf16.mxu0 0
        %665 = vmatpush1.bf16.msra.mxu0 0
        %666 = vmatprep.subr.bf16.mxu0 0
        %667 = vmatpush1.bf16.msra.mxu0 0
        %668 = vmatprep.subr.bf16.mxu0 0
        %669 = vmatpush1.bf16.msra.mxu0 0
        %670 = vmatprep.mubr.bf16.mxu0 0
        %671 = vmatmul.mubr.bf16.gmra.mrb[0].mxu0 %v554
        %v672 = vpop.f32.mrb[0].mxu0
        %v673 = vadd.f32 0.0, %v672
        %v674 = vpop.f32.mrb[0].mxu0
        %v675 = vadd.f32 0.0, %v674
        %v676 = vpop.f32.mrb[0].mxu0
        %v677 = vpop.f32.mrb[0].mxu0
        %678 = vdwg.mxu0
        %679 = vmatprep.subr.bf16.mxu0 %v308
        %680 = vmatpush1.bf16.msra.mxu0 %v305
        %681 = vmatprep.subr.bf16.mxu0 0
        %682 = vmatpush1.bf16.msra.mxu0 0
        %683 = vmatprep.subr.bf16.mxu0 0
        %684 = vmatpush1.bf16.msra.mxu0 0
        %685 = vmatprep.subr.bf16.mxu0 0
        %686 = vmatpush1.bf16.msra.mxu0 0
        %687 = vmatprep.subr.bf16.mxu0 0
        %688 = vmatpush1.bf16.msra.mxu0 0
        %689 = vmatprep.subr.bf16.mxu0 0
        %690 = vmatpush1.bf16.msra.mxu0 0
        %691 = vmatprep.subr.bf16.mxu0 0
        %692 = vmatpush1.bf16.msra.mxu0 0
        %693 = vmatprep.subr.bf16.mxu0 0
        %694 = vmatpush1.bf16.msra.mxu0 0
        %695 = vmatprep.subr.bf16.mxu0 0
        %696 = vmatpush1.bf16.msra.mxu0 0
        %697 = vmatprep.subr.bf16.mxu0 0
        %698 = vmatpush1.bf16.msra.mxu0 0
        %699 = vmatprep.subr.bf16.mxu0 0
        %700 = vmatpush1.bf16.msra.mxu0 0
        %701 = vmatprep.subr.bf16.mxu0 0
        %702 = vmatpush1.bf16.msra.mxu0 0
        %703 = vmatprep.subr.bf16.mxu0 0
        %704 = vmatpush1.bf16.msra.mxu0 0
        %705 = vmatprep.subr.bf16.mxu0 0
        %706 = vmatpush1.bf16.msra.mxu0 0
        %707 = vmatprep.subr.bf16.mxu0 0
        %708 = vmatpush1.bf16.msra.mxu0 0
        %709 = vmatprep.subr.bf16.mxu0 0
        %710 = vmatpush1.bf16.msra.mxu0 0
        %711 = vmatprep.mubr.bf16.mxu0 0
        %712 = vmatmul.mubr.bf16.gmra.mrb[0].mxu0 %v554
        %v713 = vpop.f32.mrb[0].mxu0
        %v714 = vadd.f32 0.0, %v713
        %v715 = vpop.f32.mrb[0].mxu0
        %v716 = vadd.f32 0.0, %v715
        %v717 = vpop.f32.mrb[0].mxu0
        %v718 = vpop.f32.mrb[0].mxu0
        %719 = vdwg.mxu0
        %720 = vrot.lane.b32.xlu0 %v591, 32
        %v721 = vpop.permute.xlu0 %720
        %722 = vrot.lane.b32.xlu0 %v593, 32
        %v723 = vpop.permute.xlu0 %722
        %724 = vrot.lane.b32.xlu0 %v632, 32
        %v725 = vpop.permute.xlu0 %724
        %726 = vrot.lane.b32.xlu0 %v634, 32
        %v727 = vpop.permute.xlu0 %726
        %728 = vrot.lane.b32.xlu0 %v673, 32
        %v729 = vpop.permute.xlu0 %728
        %730 = vrot.lane.b32.xlu0 %v675, 32
        %v731 = vpop.permute.xlu0 %730
        %732 = vrot.lane.b32.xlu0 %v714, 32
        %v733 = vpop.permute.xlu0 %732
        %734 = vrot.lane.b32.xlu0 %v716, 32
        %v735 = vpop.permute.xlu0 %734
        %vm736 = vcmp.lt.s32.totalorder %v491, 32
        %v737 = vsel %vm736, %v733, %v735
        %v738 = vsel %vm736, %v731, %v733
        %v739 = vsel %vm736, %v729, %v731
        %v740 = vsel %vm736, %v727, %v729
        %v741 = vsel %vm736, %v725, %v727
        %v742 = vsel %vm736, %v723, %v725
        %v743 = vsel %vm736, %v721, %v723
        %v744 = vsel %vm736, %v735, %v721
        %s745 = scalar_lea.vmem %s2, 8
        %v746 = vld [vmem:[%s745] sm:$0xff]
        %v748 = vlaneseq
        %v749 = vshrl.u32 %v748, 7
        %v750 = vsub.s32 0, %v749
        %v751 = vrot.slane %v746, %v750
        %v752 = vlaneseq
        %v753 = vshrl.u32 %v752, 7
        %v754 = vsub.s32 1, %v753
        %v755 = vrot.slane %v746, %v754
        %v756 = vlaneseq
        %v757 = vshrl.u32 %v756, 7
        %v758 = vsub.s32 2, %v757
        %v759 = vrot.slane %v746, %v758
        %v760 = vlaneseq
        %v761 = vshrl.u32 %v760, 7
        %v762 = vsub.s32 3, %v761
        %v763 = vrot.slane %v746, %v762
        %v764 = vlaneseq
        %v765 = vshrl.u32 %v764, 7
        %v766 = vsub.s32 4, %v765
        %v767 = vrot.slane %v746, %v766
        %v768 = vlaneseq
        %v769 = vshrl.u32 %v768, 7
        %v770 = vsub.s32 5, %v769
        %v771 = vrot.slane %v746, %v770
        %v772 = vlaneseq
        %v773 = vshrl.u32 %v772, 7
        %v774 = vsub.s32 6, %v773
        %v775 = vrot.slane %v746, %v774
        %v776 = vlaneseq
        %v777 = vshrl.u32 %v776, 7
        %v778 = vsub.s32 7, %v777
        %v779 = vrot.slane %v746, %v778
        %v788 = vmul.f32 %v744, %v751
        %v789 = vmul.f32 %v743, %v755
        %v790 = vmul.f32 %v742, %v759
        %v791 = vmul.f32 %v741, %v763
        %v792 = vmul.f32 %v740, %v767
        %v793 = vmul.f32 %v739, %v771
        %v794 = vmul.f32 %v738, %v775
        %v795 = vmul.f32 %v737, %v779
        %v796 = vadd.f32 %v543, %v788
        %v797 = vadd.f32 %v544, %v789
        %v798 = vadd.f32 %v545, %v790
        %v799 = vadd.f32 %v546, %v791
        %v800 = vadd.f32 %v547, %v792
        %v801 = vadd.f32 %v548, %v793
        %v802 = vadd.f32 %v549, %v794
        %v803 = vadd.f32 %v550, %v795
        %s804 = scalar_lea.vmem %s1, 8
        %v805 = vld [vmem:[%s804] sm:$0xf]
        %v807 = vsel %vm281, %v805, 0
        %809 = vmatprep.subr.bf16.mxu0 %v290
        %810 = vmatpush1.bf16.msra.mxu0 %v287
        %811 = vmatprep.subr.bf16.mxu0 0
        %812 = vmatpush1.bf16.msra.mxu0 0
        %813 = vmatprep.subr.bf16.mxu0 0
        %814 = vmatpush1.bf16.msra.mxu0 0
        %815 = vmatprep.subr.bf16.mxu0 0
        %816 = vmatpush1.bf16.msra.mxu0 0
        %817 = vmatprep.subr.bf16.mxu0 0
        %818 = vmatpush1.bf16.msra.mxu0 0
        %819 = vmatprep.subr.bf16.mxu0 0
        %820 = vmatpush1.bf16.msra.mxu0 0
        %821 = vmatprep.subr.bf16.mxu0 0
        %822 = vmatpush1.bf16.msra.mxu0 0
        %823 = vmatprep.subr.bf16.mxu0 0
        %824 = vmatpush1.bf16.msra.mxu0 0
        %825 = vmatprep.subr.bf16.mxu0 0
        %826 = vmatpush1.bf16.msra.mxu0 0
        %827 = vmatprep.subr.bf16.mxu0 0
        %828 = vmatpush1.bf16.msra.mxu0 0
        %829 = vmatprep.subr.bf16.mxu0 0
        %830 = vmatpush1.bf16.msra.mxu0 0
        %831 = vmatprep.subr.bf16.mxu0 0
        %832 = vmatpush1.bf16.msra.mxu0 0
        %833 = vmatprep.subr.bf16.mxu0 0
        %834 = vmatpush1.bf16.msra.mxu0 0
        %835 = vmatprep.subr.bf16.mxu0 0
        %836 = vmatpush1.bf16.msra.mxu0 0
        %837 = vmatprep.subr.bf16.mxu0 0
        %838 = vmatpush1.bf16.msra.mxu0 0
        %839 = vmatprep.subr.bf16.mxu0 0
        %840 = vmatpush1.bf16.msra.mxu0 0
        %841 = vmatprep.mubr.bf16.mxu0 0
        %842 = vmatmul.mubr.bf16.gmra.mrb[0].mxu0 %v807
        %v843 = vpop.f32.mrb[0].mxu0
        %v844 = vadd.f32 0.0, %v843
        %v845 = vpop.f32.mrb[0].mxu0
        %v846 = vadd.f32 0.0, %v845
        %v847 = vpop.f32.mrb[0].mxu0
        %v848 = vpop.f32.mrb[0].mxu0
        %849 = vdwg.mxu0
        %850 = vmatprep.subr.bf16.mxu0 %v296
        %851 = vmatpush1.bf16.msra.mxu0 %v293
        %852 = vmatprep.subr.bf16.mxu0 0
        %853 = vmatpush1.bf16.msra.mxu0 0
        %854 = vmatprep.subr.bf16.mxu0 0
        %855 = vmatpush1.bf16.msra.mxu0 0
        %856 = vmatprep.subr.bf16.mxu0 0
        %857 = vmatpush1.bf16.msra.mxu0 0
        %858 = vmatprep.subr.bf16.mxu0 0
        %859 = vmatpush1.bf16.msra.mxu0 0
        %860 = vmatprep.subr.bf16.mxu0 0
        %861 = vmatpush1.bf16.msra.mxu0 0
        %862 = vmatprep.subr.bf16.mxu0 0
        %863 = vmatpush1.bf16.msra.mxu0 0
        %864 = vmatprep.subr.bf16.mxu0 0
        %865 = vmatpush1.bf16.msra.mxu0 0
        %866 = vmatprep.subr.bf16.mxu0 0
        %867 = vmatpush1.bf16.msra.mxu0 0
        %868 = vmatprep.subr.bf16.mxu0 0
        %869 = vmatpush1.bf16.msra.mxu0 0
        %870 = vmatprep.subr.bf16.mxu0 0
        %871 = vmatpush1.bf16.msra.mxu0 0
        %872 = vmatprep.subr.bf16.mxu0 0
        %873 = vmatpush1.bf16.msra.mxu0 0
        %874 = vmatprep.subr.bf16.mxu0 0
        %875 = vmatpush1.bf16.msra.mxu0 0
        %876 = vmatprep.subr.bf16.mxu0 0
        %877 = vmatpush1.bf16.msra.mxu0 0
        %878 = vmatprep.subr.bf16.mxu0 0
        %879 = vmatpush1.bf16.msra.mxu0 0
        %880 = vmatprep.subr.bf16.mxu0 0
        %881 = vmatpush1.bf16.msra.mxu0 0
        %882 = vmatprep.mubr.bf16.mxu0 0
        %883 = vmatmul.mubr.bf16.gmra.mrb[0].mxu0 %v807
        %v884 = vpop.f32.mrb[0].mxu0
        %v885 = vadd.f32 0.0, %v884
        %v886 = vpop.f32.mrb[0].mxu0
        %v887 = vadd.f32 0.0, %v886
        %v888 = vpop.f32.mrb[0].mxu0
        %v889 = vpop.f32.mrb[0].mxu0
        %890 = vdwg.mxu0
        %891 = vmatprep.subr.bf16.mxu0 %v302
        %892 = vmatpush1.bf16.msra.mxu0 %v299
        %893 = vmatprep.subr.bf16.mxu0 0
        %894 = vmatpush1.bf16.msra.mxu0 0
        %895 = vmatprep.subr.bf16.mxu0 0
        %896 = vmatpush1.bf16.msra.mxu0 0
        %897 = vmatprep.subr.bf16.mxu0 0
        %898 = vmatpush1.bf16.msra.mxu0 0
        %899 = vmatprep.subr.bf16.mxu0 0
        %900 = vmatpush1.bf16.msra.mxu0 0
        %901 = vmatprep.subr.bf16.mxu0 0
        %902 = vmatpush1.bf16.msra.mxu0 0
        %903 = vmatprep.subr.bf16.mxu0 0
        %904 = vmatpush1.bf16.msra.mxu0 0
        %905 = vmatprep.subr.bf16.mxu0 0
        %906 = vmatpush1.bf16.msra.mxu0 0
        %907 = vmatprep.subr.bf16.mxu0 0
        %908 = vmatpush1.bf16.msra.mxu0 0
        %909 = vmatprep.subr.bf16.mxu0 0
        %910 = vmatpush1.bf16.msra.mxu0 0
        %911 = vmatprep.subr.bf16.mxu0 0
        %912 = vmatpush1.bf16.msra.mxu0 0
        %913 = vmatprep.subr.bf16.mxu0 0
        %914 = vmatpush1.bf16.msra.mxu0 0
        %915 = vmatprep.subr.bf16.mxu0 0
        %916 = vmatpush1.bf16.msra.mxu0 0
        %917 = vmatprep.subr.bf16.mxu0 0
        %918 = vmatpush1.bf16.msra.mxu0 0
        %919 = vmatprep.subr.bf16.mxu0 0
        %920 = vmatpush1.bf16.msra.mxu0 0
        %921 = vmatprep.subr.bf16.mxu0 0
        %922 = vmatpush1.bf16.msra.mxu0 0
        %923 = vmatprep.mubr.bf16.mxu0 0
        %924 = vmatmul.mubr.bf16.gmra.mrb[0].mxu0 %v807
        %v925 = vpop.f32.mrb[0].mxu0
        %v926 = vadd.f32 0.0, %v925
        %v927 = vpop.f32.mrb[0].mxu0
        %v928 = vadd.f32 0.0, %v927
        %v929 = vpop.f32.mrb[0].mxu0
        %v930 = vpop.f32.mrb[0].mxu0
        %931 = vdwg.mxu0
        %932 = vmatprep.subr.bf16.mxu0 %v308
        %933 = vmatpush1.bf16.msra.mxu0 %v305
        %934 = vmatprep.subr.bf16.mxu0 0
        %935 = vmatpush1.bf16.msra.mxu0 0
        %936 = vmatprep.subr.bf16.mxu0 0
        %937 = vmatpush1.bf16.msra.mxu0 0
        %938 = vmatprep.subr.bf16.mxu0 0
        %939 = vmatpush1.bf16.msra.mxu0 0
        %940 = vmatprep.subr.bf16.mxu0 0
        %941 = vmatpush1.bf16.msra.mxu0 0
        %942 = vmatprep.subr.bf16.mxu0 0
        %943 = vmatpush1.bf16.msra.mxu0 0
        %944 = vmatprep.subr.bf16.mxu0 0
        %945 = vmatpush1.bf16.msra.mxu0 0
        %946 = vmatprep.subr.bf16.mxu0 0
        %947 = vmatpush1.bf16.msra.mxu0 0
        %948 = vmatprep.subr.bf16.mxu0 0
        %949 = vmatpush1.bf16.msra.mxu0 0
        %950 = vmatprep.subr.bf16.mxu0 0
        %951 = vmatpush1.bf16.msra.mxu0 0
        %952 = vmatprep.subr.bf16.mxu0 0
        %953 = vmatpush1.bf16.msra.mxu0 0
        %954 = vmatprep.subr.bf16.mxu0 0
        %955 = vmatpush1.bf16.msra.mxu0 0
        %956 = vmatprep.subr.bf16.mxu0 0
        %957 = vmatpush1.bf16.msra.mxu0 0
        %958 = vmatprep.subr.bf16.mxu0 0
        %959 = vmatpush1.bf16.msra.mxu0 0
        %960 = vmatprep.subr.bf16.mxu0 0
        %961 = vmatpush1.bf16.msra.mxu0 0
        %962 = vmatprep.subr.bf16.mxu0 0
        %963 = vmatpush1.bf16.msra.mxu0 0
        %964 = vmatprep.mubr.bf16.mxu0 0
        %965 = vmatmul.mubr.bf16.gmra.mrb[0].mxu0 %v807
        %v966 = vpop.f32.mrb[0].mxu0
        %v967 = vadd.f32 0.0, %v966
        %v968 = vpop.f32.mrb[0].mxu0
        %v969 = vadd.f32 0.0, %v968
        %v970 = vpop.f32.mrb[0].mxu0
        %v971 = vpop.f32.mrb[0].mxu0
        %972 = vdwg.mxu0
        %973 = vrot.lane.b32.xlu0 %v844, 31
        %v974 = vpop.permute.xlu0 %973
        %975 = vrot.lane.b32.xlu0 %v846, 31
        %v976 = vpop.permute.xlu0 %975
        %977 = vrot.lane.b32.xlu0 %v885, 31
        %v978 = vpop.permute.xlu0 %977
        %979 = vrot.lane.b32.xlu0 %v887, 31
        %v980 = vpop.permute.xlu0 %979
        %981 = vrot.lane.b32.xlu0 %v926, 31
        %v982 = vpop.permute.xlu0 %981
        %983 = vrot.lane.b32.xlu0 %v928, 31
        %v984 = vpop.permute.xlu0 %983
        %985 = vrot.lane.b32.xlu0 %v967, 31
        %v986 = vpop.permute.xlu0 %985
        %987 = vrot.lane.b32.xlu0 %v969, 31
        %v988 = vpop.permute.xlu0 %987
        %vm989 = vcmp.lt.s32.totalorder %v491, 31
        %v990 = vsel %vm989, %v986, %v988
        %v991 = vsel %vm989, %v984, %v986
        %v992 = vsel %vm989, %v982, %v984
        %v993 = vsel %vm989, %v980, %v982
        %v994 = vsel %vm989, %v978, %v980
        %v995 = vsel %vm989, %v976, %v978
        %v996 = vsel %vm989, %v974, %v976
        %v997 = vsel %vm989, %v988, %v974
        %s998 = scalar_lea.vmem %s2, 16
        %v999 = vld [vmem:[%s998] sm:$0xff]
        %v1001 = vlaneseq
        %v1002 = vshrl.u32 %v1001, 7
        %v1003 = vsub.s32 0, %v1002
        %v1004 = vrot.slane %v999, %v1003
        %v1005 = vlaneseq
        %v1006 = vshrl.u32 %v1005, 7
        %v1007 = vsub.s32 1, %v1006
        %v1008 = vrot.slane %v999, %v1007
        %v1009 = vlaneseq
        %v1010 = vshrl.u32 %v1009, 7
        %v1011 = vsub.s32 2, %v1010
        %v1012 = vrot.slane %v999, %v1011
        %v1013 = vlaneseq
        %v1014 = vshrl.u32 %v1013, 7
        %v1015 = vsub.s32 3, %v1014
        %v1016 = vrot.slane %v999, %v1015
        %v1017 = vlaneseq
        %v1018 = vshrl.u32 %v1017, 7
        %v1019 = vsub.s32 4, %v1018
        %v1020 = vrot.slane %v999, %v1019
        %v1021 = vlaneseq
        %v1022 = vshrl.u32 %v1021, 7
        %v1023 = vsub.s32 5, %v1022
        %v1024 = vrot.slane %v999, %v1023
        %v1025 = vlaneseq
        %v1026 = vshrl.u32 %v1025, 7
        %v1027 = vsub.s32 6, %v1026
        %v1028 = vrot.slane %v999, %v1027
        %v1029 = vlaneseq
        %v1030 = vshrl.u32 %v1029, 7
        %v1031 = vsub.s32 7, %v1030
        %v1032 = vrot.slane %v999, %v1031
        %v1041 = vmul.f32 %v997, %v1004
        %v1042 = vmul.f32 %v996, %v1008
        %v1043 = vmul.f32 %v995, %v1012
        %v1044 = vmul.f32 %v994, %v1016
        %v1045 = vmul.f32 %v993, %v1020
        %v1046 = vmul.f32 %v992, %v1024
        %v1047 = vmul.f32 %v991, %v1028
        %v1048 = vmul.f32 %v990, %v1032
        %v1049 = vadd.f32 %v796, %v1041
        %v1050 = vadd.f32 %v797, %v1042
        %v1051 = vadd.f32 %v798, %v1043
        %v1052 = vadd.f32 %v799, %v1044
        %v1053 = vadd.f32 %v800, %v1045
        %v1054 = vadd.f32 %v801, %v1046
        %v1055 = vadd.f32 %v802, %v1047
        %v1056 = vadd.f32 %v803, %v1048
        %s1057 = scalar_lea.vmem %s1, 12
        %v1058 = vld [vmem:[%s1057] sm:$0xf]
        %v1060 = vsel %vm281, %v1058, 0
        %1062 = vmatprep.subr.bf16.mxu0 %v290
        %1063 = vmatpush1.bf16.msra.mxu0 %v287
        %1064 = vmatprep.subr.bf16.mxu0 0
        %1065 = vmatpush1.bf16.msra.mxu0 0
        %1066 = vmatprep.subr.bf16.mxu0 0
        %1067 = vmatpush1.bf16.msra.mxu0 0
        %1068 = vmatprep.subr.bf16.mxu0 0
        %1069 = vmatpush1.bf16.msra.mxu0 0
        %1070 = vmatprep.subr.bf16.mxu0 0
        %1071 = vmatpush1.bf16.msra.mxu0 0
        %1072 = vmatprep.subr.bf16.mxu0 0
        %1073 = vmatpush1.bf16.msra.mxu0 0
        %1074 = vmatprep.subr.bf16.mxu0 0
        %1075 = vmatpush1.bf16.msra.mxu0 0
        %1076 = vmatprep.subr.bf16.mxu0 0
        %1077 = vmatpush1.bf16.msra.mxu0 0
        %1078 = vmatprep.subr.bf16.mxu0 0
        %1079 = vmatpush1.bf16.msra.mxu0 0
        %1080 = vmatprep.subr.bf16.mxu0 0
        %1081 = vmatpush1.bf16.msra.mxu0 0
        %1082 = vmatprep.subr.bf16.mxu0 0
        %1083 = vmatpush1.bf16.msra.mxu0 0
        %1084 = vmatprep.subr.bf16.mxu0 0
        %1085 = vmatpush1.bf16.msra.mxu0 0
        %1086 = vmatprep.subr.bf16.mxu0 0
        %1087 = vmatpush1.bf16.msra.mxu0 0
        %1088 = vmatprep.subr.bf16.mxu0 0
        %1089 = vmatpush1.bf16.msra.mxu0 0
        %1090 = vmatprep.subr.bf16.mxu0 0
        %1091 = vmatpush1.bf16.msra.mxu0 0
        %1092 = vmatprep.subr.bf16.mxu0 0
        %1093 = vmatpush1.bf16.msra.mxu0 0
        %1094 = vmatprep.mubr.bf16.mxu0 0
        %1095 = vmatmul.mubr.bf16.gmra.mrb[0].mxu0 %v1060
        %v1096 = vpop.f32.mrb[0].mxu0
        %v1097 = vadd.f32 0.0, %v1096
        %v1098 = vpop.f32.mrb[0].mxu0
        %v1099 = vadd.f32 0.0, %v1098
        %v1100 = vpop.f32.mrb[0].mxu0
        %v1101 = vpop.f32.mrb[0].mxu0
        %1102 = vdwg.mxu0
        %1103 = vmatprep.subr.bf16.mxu0 %v296
        %1104 = vmatpush1.bf16.msra.mxu0 %v293
        %1105 = vmatprep.subr.bf16.mxu0 0
        %1106 = vmatpush1.bf16.msra.mxu0 0
        %1107 = vmatprep.subr.bf16.mxu0 0
        %1108 = vmatpush1.bf16.msra.mxu0 0
        %1109 = vmatprep.subr.bf16.mxu0 0
        %1110 = vmatpush1.bf16.msra.mxu0 0
        %1111 = vmatprep.subr.bf16.mxu0 0
        %1112 = vmatpush1.bf16.msra.mxu0 0
        %1113 = vmatprep.subr.bf16.mxu0 0
        %1114 = vmatpush1.bf16.msra.mxu0 0
        %1115 = vmatprep.subr.bf16.mxu0 0
        %1116 = vmatpush1.bf16.msra.mxu0 0
        %1117 = vmatprep.subr.bf16.mxu0 0
        %1118 = vmatpush1.bf16.msra.mxu0 0
        %1119 = vmatprep.subr.bf16.mxu0 0
        %1120 = vmatpush1.bf16.msra.mxu0 0
        %1121 = vmatprep.subr.bf16.mxu0 0
        %1122 = vmatpush1.bf16.msra.mxu0 0
        %1123 = vmatprep.subr.bf16.mxu0 0
        %1124 = vmatpush1.bf16.msra.mxu0 0
        %1125 = vmatprep.subr.bf16.mxu0 0
        %1126 = vmatpush1.bf16.msra.mxu0 0
        %1127 = vmatprep.subr.bf16.mxu0 0
        %1128 = vmatpush1.bf16.msra.mxu0 0
        %1129 = vmatprep.subr.bf16.mxu0 0
        %1130 = vmatpush1.bf16.msra.mxu0 0
        %1131 = vmatprep.subr.bf16.mxu0 0
        %1132 = vmatpush1.bf16.msra.mxu0 0
        %1133 = vmatprep.subr.bf16.mxu0 0
        %1134 = vmatpush1.bf16.msra.mxu0 0
        %1135 = vmatprep.mubr.bf16.mxu0 0
        %1136 = vmatmul.mubr.bf16.gmra.mrb[0].mxu0 %v1060
        %v1137 = vpop.f32.mrb[0].mxu0
        %v1138 = vadd.f32 0.0, %v1137
        %v1139 = vpop.f32.mrb[0].mxu0
        %v1140 = vadd.f32 0.0, %v1139
        %v1141 = vpop.f32.mrb[0].mxu0
        %v1142 = vpop.f32.mrb[0].mxu0
        %1143 = vdwg.mxu0
        %1144 = vmatprep.subr.bf16.mxu0 %v302
        %1145 = vmatpush1.bf16.msra.mxu0 %v299
        %1146 = vmatprep.subr.bf16.mxu0 0
        %1147 = vmatpush1.bf16.msra.mxu0 0
        %1148 = vmatprep.subr.bf16.mxu0 0
        %1149 = vmatpush1.bf16.msra.mxu0 0
        %1150 = vmatprep.subr.bf16.mxu0 0
        %1151 = vmatpush1.bf16.msra.mxu0 0
        %1152 = vmatprep.subr.bf16.mxu0 0
        %1153 = vmatpush1.bf16.msra.mxu0 0
        %1154 = vmatprep.subr.bf16.mxu0 0
        %1155 = vmatpush1.bf16.msra.mxu0 0
        %1156 = vmatprep.subr.bf16.mxu0 0
        %1157 = vmatpush1.bf16.msra.mxu0 0
        %1158 = vmatprep.subr.bf16.mxu0 0
        %1159 = vmatpush1.bf16.msra.mxu0 0
        %1160 = vmatprep.subr.bf16.mxu0 0
        %1161 = vmatpush1.bf16.msra.mxu0 0
        %1162 = vmatprep.subr.bf16.mxu0 0
        %1163 = vmatpush1.bf16.msra.mxu0 0
        %1164 = vmatprep.subr.bf16.mxu0 0
        %1165 = vmatpush1.bf16.msra.mxu0 0
        %1166 = vmatprep.subr.bf16.mxu0 0
        %1167 = vmatpush1.bf16.msra.mxu0 0
        %1168 = vmatprep.subr.bf16.mxu0 0
        %1169 = vmatpush1.bf16.msra.mxu0 0
        %1170 = vmatprep.subr.bf16.mxu0 0
        %1171 = vmatpush1.bf16.msra.mxu0 0
        %1172 = vmatprep.subr.bf16.mxu0 0
        %1173 = vmatpush1.bf16.msra.mxu0 0
        %1174 = vmatprep.subr.bf16.mxu0 0
        %1175 = vmatpush1.bf16.msra.mxu0 0
        %1176 = vmatprep.mubr.bf16.mxu0 0
        %1177 = vmatmul.mubr.bf16.gmra.mrb[0].mxu0 %v1060
        %v1178 = vpop.f32.mrb[0].mxu0
        %v1179 = vadd.f32 0.0, %v1178
        %v1180 = vpop.f32.mrb[0].mxu0
        %v1181 = vadd.f32 0.0, %v1180
        %v1182 = vpop.f32.mrb[0].mxu0
        %v1183 = vpop.f32.mrb[0].mxu0
        %1184 = vdwg.mxu0
        %1185 = vmatprep.subr.bf16.mxu0 %v308
        %1186 = vmatpush1.bf16.msra.mxu0 %v305
        %1187 = vmatprep.subr.bf16.mxu0 0
        %1188 = vmatpush1.bf16.msra.mxu0 0
        %1189 = vmatprep.subr.bf16.mxu0 0
        %1190 = vmatpush1.bf16.msra.mxu0 0
        %1191 = vmatprep.subr.bf16.mxu0 0
        %1192 = vmatpush1.bf16.msra.mxu0 0
        %1193 = vmatprep.subr.bf16.mxu0 0
        %1194 = vmatpush1.bf16.msra.mxu0 0
        %1195 = vmatprep.subr.bf16.mxu0 0
        %1196 = vmatpush1.bf16.msra.mxu0 0
        %1197 = vmatprep.subr.bf16.mxu0 0
        %1198 = vmatpush1.bf16.msra.mxu0 0
        %1199 = vmatprep.subr.bf16.mxu0 0
        %1200 = vmatpush1.bf16.msra.mxu0 0
        %1201 = vmatprep.subr.bf16.mxu0 0
        %1202 = vmatpush1.bf16.msra.mxu0 0
        %1203 = vmatprep.subr.bf16.mxu0 0
        %1204 = vmatpush1.bf16.msra.mxu0 0
        %1205 = vmatprep.subr.bf16.mxu0 0
        %1206 = vmatpush1.bf16.msra.mxu0 0
        %1207 = vmatprep.subr.bf16.mxu0 0
        %1208 = vmatpush1.bf16.msra.mxu0 0
        %1209 = vmatprep.subr.bf16.mxu0 0
        %1210 = vmatpush1.bf16.msra.mxu0 0
        %1211 = vmatprep.subr.bf16.mxu0 0
        %1212 = vmatpush1.bf16.msra.mxu0 0
        %1213 = vmatprep.subr.bf16.mxu0 0
        %1214 = vmatpush1.bf16.msra.mxu0 0
        %1215 = vmatprep.subr.bf16.mxu0 0
        %1216 = vmatpush1.bf16.msra.mxu0 0
        %1217 = vmatprep.mubr.bf16.mxu0 0
        %1218 = vmatmul.mubr.bf16.gmra.mrb[0].mxu0 %v1060
        %v1219 = vpop.f32.mrb[0].mxu0
        %v1220 = vadd.f32 0.0, %v1219
        %v1221 = vpop.f32.mrb[0].mxu0
        %v1222 = vadd.f32 0.0, %v1221
        %v1223 = vpop.f32.mrb[0].mxu0
        %v1224 = vpop.f32.mrb[0].mxu0
        %1225 = vdwg.mxu0
        %1226 = vrot.lane.b32.xlu0 %v1097, 1
        %v1227 = vpop.permute.xlu0 %1226
        %1228 = vrot.lane.b32.xlu0 %v1099, 1
        %v1229 = vpop.permute.xlu0 %1228
        %1230 = vrot.lane.b32.xlu0 %v1138, 1
        %v1231 = vpop.permute.xlu0 %1230
        %1232 = vrot.lane.b32.xlu0 %v1140, 1
        %v1233 = vpop.permute.xlu0 %1232
        %1234 = vrot.lane.b32.xlu0 %v1179, 1
        %v1235 = vpop.permute.xlu0 %1234
        %1236 = vrot.lane.b32.xlu0 %v1181, 1
        %v1237 = vpop.permute.xlu0 %1236
        %1238 = vrot.lane.b32.xlu0 %v1220, 1
        %v1239 = vpop.permute.xlu0 %1238
        %1240 = vrot.lane.b32.xlu0 %v1222, 1
        %v1241 = vpop.permute.xlu0 %1240
        %vm1242 = vcmp.lt.s32.totalorder %v491, 1
        %v1243 = vsel %vm1242, %v1239, %v1241
        %v1244 = vsel %vm1242, %v1237, %v1239
        %v1245 = vsel %vm1242, %v1235, %v1237
        %v1246 = vsel %vm1242, %v1233, %v1235
        %v1247 = vsel %vm1242, %v1231, %v1233
        %v1248 = vsel %vm1242, %v1229, %v1231
        %v1249 = vsel %vm1242, %v1227, %v1229
        %v1250 = vsel %vm1242, %v1241, %v1227
        %s1251 = scalar_lea.vmem %s2, 24
        %v1252 = vld [vmem:[%s1251] sm:$0xff]
        %v1254 = vlaneseq
        %v1255 = vshrl.u32 %v1254, 7
        %v1256 = vsub.s32 0, %v1255
        %v1257 = vrot.slane %v1252, %v1256
        %v1258 = vlaneseq
        %v1259 = vshrl.u32 %v1258, 7
        %v1260 = vsub.s32 1, %v1259
        %v1261 = vrot.slane %v1252, %v1260
        %v1262 = vlaneseq
        %v1263 = vshrl.u32 %v1262, 7
        %v1264 = vsub.s32 2, %v1263
        %v1265 = vrot.slane %v1252, %v1264
        %v1266 = vlaneseq
        %v1267 = vshrl.u32 %v1266, 7
        %v1268 = vsub.s32 3, %v1267
        %v1269 = vrot.slane %v1252, %v1268
        %v1270 = vlaneseq
        %v1271 = vshrl.u32 %v1270, 7
        %v1272 = vsub.s32 4, %v1271
        %v1273 = vrot.slane %v1252, %v1272
        %v1274 = vlaneseq
        %v1275 = vshrl.u32 %v1274, 7
        %v1276 = vsub.s32 5, %v1275
        %v1277 = vrot.slane %v1252, %v1276
        %v1278 = vlaneseq
        %v1279 = vshrl.u32 %v1278, 7
        %v1280 = vsub.s32 6, %v1279
        %v1281 = vrot.slane %v1252, %v1280
        %v1282 = vlaneseq
        %v1283 = vshrl.u32 %v1282, 7
        %v1284 = vsub.s32 7, %v1283
        %v1285 = vrot.slane %v1252, %v1284
        %v1294 = vmul.f32 %v1250, %v1257
        %v1295 = vmul.f32 %v1249, %v1261
        %v1296 = vmul.f32 %v1248, %v1265
        %v1297 = vmul.f32 %v1247, %v1269
        %v1298 = vmul.f32 %v1246, %v1273
        %v1299 = vmul.f32 %v1245, %v1277
        %v1300 = vmul.f32 %v1244, %v1281
        %v1301 = vmul.f32 %v1243, %v1285
        %v1302 = vadd.f32 %v1049, %v1294
        %v1303 = vadd.f32 %v1050, %v1295
        %v1304 = vadd.f32 %v1051, %v1296
        %v1305 = vadd.f32 %v1052, %v1297
        %v1306 = vadd.f32 %v1053, %v1298
        %v1307 = vadd.f32 %v1054, %v1299
        %v1308 = vadd.f32 %v1055, %v1300
        %v1309 = vadd.f32 %v1056, %v1301
        %s1310 = scalar_lea.vmem %s1, 16
        %v1311 = vld [vmem:[%s1310] sm:$0xf]
        %v1313 = vsel %vm281, %v1311, 0
        %1315 = vmatprep.subr.bf16.mxu0 %v290
        %1316 = vmatpush1.bf16.msra.mxu0 %v287
        %1317 = vmatprep.subr.bf16.mxu0 0
        %1318 = vmatpush1.bf16.msra.mxu0 0
        %1319 = vmatprep.subr.bf16.mxu0 0
        %1320 = vmatpush1.bf16.msra.mxu0 0
        %1321 = vmatprep.subr.bf16.mxu0 0
        %1322 = vmatpush1.bf16.msra.mxu0 0
        %1323 = vmatprep.subr.bf16.mxu0 0
        %1324 = vmatpush1.bf16.msra.mxu0 0
        %1325 = vmatprep.subr.bf16.mxu0 0
        %1326 = vmatpush1.bf16.msra.mxu0 0
        %1327 = vmatprep.subr.bf16.mxu0 0
        %1328 = vmatpush1.bf16.msra.mxu0 0
        %1329 = vmatprep.subr.bf16.mxu0 0
        %1330 = vmatpush1.bf16.msra.mxu0 0
        %1331 = vmatprep.subr.bf16.mxu0 0
        %1332 = vmatpush1.bf16.msra.mxu0 0
        %1333 = vmatprep.subr.bf16.mxu0 0
        %1334 = vmatpush1.bf16.msra.mxu0 0
        %1335 = vmatprep.subr.bf16.mxu0 0
        %1336 = vmatpush1.bf16.msra.mxu0 0
        %1337 = vmatprep.subr.bf16.mxu0 0
        %1338 = vmatpush1.bf16.msra.mxu0 0
        %1339 = vmatprep.subr.bf16.mxu0 0
        %1340 = vmatpush1.bf16.msra.mxu0 0
        %1341 = vmatprep.subr.bf16.mxu0 0
        %1342 = vmatpush1.bf16.msra.mxu0 0
        %1343 = vmatprep.subr.bf16.mxu0 0
        %1344 = vmatpush1.bf16.msra.mxu0 0
        %1345 = vmatprep.subr.bf16.mxu0 0
        %1346 = vmatpush1.bf16.msra.mxu0 0
        %1347 = vmatprep.mubr.bf16.mxu0 0
        %1348 = vmatmul.mubr.bf16.gmra.mrb[0].mxu0 %v1313
        %v1349 = vpop.f32.mrb[0].mxu0
        %v1350 = vadd.f32 0.0, %v1349
        %v1351 = vpop.f32.mrb[0].mxu0
        %v1352 = vadd.f32 0.0, %v1351
        %v1353 = vpop.f32.mrb[0].mxu0
        %v1354 = vpop.f32.mrb[0].mxu0
        %1355 = vdwg.mxu0
        %1356 = vmatprep.subr.bf16.mxu0 %v296
        %1357 = vmatpush1.bf16.msra.mxu0 %v293
        %1358 = vmatprep.subr.bf16.mxu0 0
        %1359 = vmatpush1.bf16.msra.mxu0 0
        %1360 = vmatprep.subr.bf16.mxu0 0
        %1361 = vmatpush1.bf16.msra.mxu0 0
        %1362 = vmatprep.subr.bf16.mxu0 0
        %1363 = vmatpush1.bf16.msra.mxu0 0
        %1364 = vmatprep.subr.bf16.mxu0 0
        %1365 = vmatpush1.bf16.msra.mxu0 0
        %1366 = vmatprep.subr.bf16.mxu0 0
        %1367 = vmatpush1.bf16.msra.mxu0 0
        %1368 = vmatprep.subr.bf16.mxu0 0
        %1369 = vmatpush1.bf16.msra.mxu0 0
        %1370 = vmatprep.subr.bf16.mxu0 0
        %1371 = vmatpush1.bf16.msra.mxu0 0
        %1372 = vmatprep.subr.bf16.mxu0 0
        %1373 = vmatpush1.bf16.msra.mxu0 0
        %1374 = vmatprep.subr.bf16.mxu0 0
        %1375 = vmatpush1.bf16.msra.mxu0 0
        %1376 = vmatprep.subr.bf16.mxu0 0
        %1377 = vmatpush1.bf16.msra.mxu0 0
        %1378 = vmatprep.subr.bf16.mxu0 0
        %1379 = vmatpush1.bf16.msra.mxu0 0
        %1380 = vmatprep.subr.bf16.mxu0 0
        %1381 = vmatpush1.bf16.msra.mxu0 0
        %1382 = vmatprep.subr.bf16.mxu0 0
        %1383 = vmatpush1.bf16.msra.mxu0 0
        %1384 = vmatprep.subr.bf16.mxu0 0
        %1385 = vmatpush1.bf16.msra.mxu0 0
        %1386 = vmatprep.subr.bf16.mxu0 0
        %1387 = vmatpush1.bf16.msra.mxu0 0
        %1388 = vmatprep.mubr.bf16.mxu0 0
        %1389 = vmatmul.mubr.bf16.gmra.mrb[0].mxu0 %v1313
        %v1390 = vpop.f32.mrb[0].mxu0
        %v1391 = vadd.f32 0.0, %v1390
        %v1392 = vpop.f32.mrb[0].mxu0
        %v1393 = vadd.f32 0.0, %v1392
        %v1394 = vpop.f32.mrb[0].mxu0
        %v1395 = vpop.f32.mrb[0].mxu0
        %1396 = vdwg.mxu0
        %1397 = vmatprep.subr.bf16.mxu0 %v302
        %1398 = vmatpush1.bf16.msra.mxu0 %v299
        %1399 = vmatprep.subr.bf16.mxu0 0
        %1400 = vmatpush1.bf16.msra.mxu0 0
        %1401 = vmatprep.subr.bf16.mxu0 0
        %1402 = vmatpush1.bf16.msra.mxu0 0
        %1403 = vmatprep.subr.bf16.mxu0 0
        %1404 = vmatpush1.bf16.msra.mxu0 0
        %1405 = vmatprep.subr.bf16.mxu0 0
        %1406 = vmatpush1.bf16.msra.mxu0 0
        %1407 = vmatprep.subr.bf16.mxu0 0
        %1408 = vmatpush1.bf16.msra.mxu0 0
        %1409 = vmatprep.subr.bf16.mxu0 0
        %1410 = vmatpush1.bf16.msra.mxu0 0
        %1411 = vmatprep.subr.bf16.mxu0 0
        %1412 = vmatpush1.bf16.msra.mxu0 0
        %1413 = vmatprep.subr.bf16.mxu0 0
        %1414 = vmatpush1.bf16.msra.mxu0 0
        %1415 = vmatprep.subr.bf16.mxu0 0
        %1416 = vmatpush1.bf16.msra.mxu0 0
        %1417 = vmatprep.subr.bf16.mxu0 0
        %1418 = vmatpush1.bf16.msra.mxu0 0
        %1419 = vmatprep.subr.bf16.mxu0 0
        %1420 = vmatpush1.bf16.msra.mxu0 0
        %1421 = vmatprep.subr.bf16.mxu0 0
        %1422 = vmatpush1.bf16.msra.mxu0 0
        %1423 = vmatprep.subr.bf16.mxu0 0
        %1424 = vmatpush1.bf16.msra.mxu0 0
        %1425 = vmatprep.subr.bf16.mxu0 0
        %1426 = vmatpush1.bf16.msra.mxu0 0
        %1427 = vmatprep.subr.bf16.mxu0 0
        %1428 = vmatpush1.bf16.msra.mxu0 0
        %1429 = vmatprep.mubr.bf16.mxu0 0
        %1430 = vmatmul.mubr.bf16.gmra.mrb[0].mxu0 %v1313
        %v1431 = vpop.f32.mrb[0].mxu0
        %v1432 = vadd.f32 0.0, %v1431
        %v1433 = vpop.f32.mrb[0].mxu0
        %v1434 = vadd.f32 0.0, %v1433
        %v1435 = vpop.f32.mrb[0].mxu0
        %v1436 = vpop.f32.mrb[0].mxu0
        %1437 = vdwg.mxu0
        %1438 = vmatprep.subr.bf16.mxu0 %v308
        %1439 = vmatpush1.bf16.msra.mxu0 %v305
        %1440 = vmatprep.subr.bf16.mxu0 0
        %1441 = vmatpush1.bf16.msra.mxu0 0
        %1442 = vmatprep.subr.bf16.mxu0 0
        %1443 = vmatpush1.bf16.msra.mxu0 0
        %1444 = vmatprep.subr.bf16.mxu0 0
        %1445 = vmatpush1.bf16.msra.mxu0 0
        %1446 = vmatprep.subr.bf16.mxu0 0
        %1447 = vmatpush1.bf16.msra.mxu0 0
        %1448 = vmatprep.subr.bf16.mxu0 0
        %1449 = vmatpush1.bf16.msra.mxu0 0
        %1450 = vmatprep.subr.bf16.mxu0 0
        %1451 = vmatpush1.bf16.msra.mxu0 0
        %1452 = vmatprep.subr.bf16.mxu0 0
        %1453 = vmatpush1.bf16.msra.mxu0 0
        %1454 = vmatprep.subr.bf16.mxu0 0
        %1455 = vmatpush1.bf16.msra.mxu0 0
        %1456 = vmatprep.subr.bf16.mxu0 0
        %1457 = vmatpush1.bf16.msra.mxu0 0
        %1458 = vmatprep.subr.bf16.mxu0 0
        %1459 = vmatpush1.bf16.msra.mxu0 0
        %1460 = vmatprep.subr.bf16.mxu0 0
        %1461 = vmatpush1.bf16.msra.mxu0 0
        %1462 = vmatprep.subr.bf16.mxu0 0
        %1463 = vmatpush1.bf16.msra.mxu0 0
        %1464 = vmatprep.subr.bf16.mxu0 0
        %1465 = vmatpush1.bf16.msra.mxu0 0
        %1466 = vmatprep.subr.bf16.mxu0 0
        %1467 = vmatpush1.bf16.msra.mxu0 0
        %1468 = vmatprep.subr.bf16.mxu0 0
        %1469 = vmatpush1.bf16.msra.mxu0 0
        %1470 = vmatprep.mubr.bf16.mxu0 0
        %1471 = vmatmul.mubr.bf16.gmra.mrb[0].mxu0 %v1313
        %v1472 = vpop.f32.mrb[0].mxu0
        %v1473 = vadd.f32 0.0, %v1472
        %v1474 = vpop.f32.mrb[0].mxu0
        %v1475 = vadd.f32 0.0, %v1474
        %v1476 = vpop.f32.mrb[0].mxu0
        %v1477 = vpop.f32.mrb[0].mxu0
        %1478 = vdwg.mxu0
        %v1479 = vadd.f32 %v1302, %v1350
        %v1480 = vadd.f32 %v1303, %v1352
        %v1481 = vadd.f32 %v1304, %v1391
        %v1482 = vadd.f32 %v1305, %v1393
        %v1483 = vadd.f32 %v1306, %v1432
        %v1484 = vadd.f32 %v1307, %v1434
        %v1485 = vadd.f32 %v1308, %v1473
        %v1486 = vadd.f32 %v1309, %v1475
        %s1487 = scalar_lea.vmem %s1, 20
        %v1488 = vld [vmem:[%s1487] sm:$0xf]
        %v1490 = vsel %vm281, %v1488, 0
        %1492 = vmatprep.subr.bf16.mxu0 %v290
        %1493 = vmatpush1.bf16.msra.mxu0 %v287
        %1494 = vmatprep.subr.bf16.mxu0 0
        %1495 = vmatpush1.bf16.msra.mxu0 0
        %1496 = vmatprep.subr.bf16.mxu0 0
        %1497 = vmatpush1.bf16.msra.mxu0 0
        %1498 = vmatprep.subr.bf16.mxu0 0
        %1499 = vmatpush1.bf16.msra.mxu0 0
        %1500 = vmatprep.subr.bf16.mxu0 0
        %1501 = vmatpush1.bf16.msra.mxu0 0
        %1502 = vmatprep.subr.bf16.mxu0 0
        %1503 = vmatpush1.bf16.msra.mxu0 0
        %1504 = vmatprep.subr.bf16.mxu0 0
        %1505 = vmatpush1.bf16.msra.mxu0 0
        %1506 = vmatprep.subr.bf16.mxu0 0
        %1507 = vmatpush1.bf16.msra.mxu0 0
        %1508 = vmatprep.subr.bf16.mxu0 0
        %1509 = vmatpush1.bf16.msra.mxu0 0
        %1510 = vmatprep.subr.bf16.mxu0 0
        %1511 = vmatpush1.bf16.msra.mxu0 0
        %1512 = vmatprep.subr.bf16.mxu0 0
        %1513 = vmatpush1.bf16.msra.mxu0 0
        %1514 = vmatprep.subr.bf16.mxu0 0
        %1515 = vmatpush1.bf16.msra.mxu0 0
        %1516 = vmatprep.subr.bf16.mxu0 0
        %1517 = vmatpush1.bf16.msra.mxu0 0
        %1518 = vmatprep.subr.bf16.mxu0 0
        %1519 = vmatpush1.bf16.msra.mxu0 0
        %1520 = vmatprep.subr.bf16.mxu0 0
        %1521 = vmatpush1.bf16.msra.mxu0 0
        %1522 = vmatprep.subr.bf16.mxu0 0
        %1523 = vmatpush1.bf16.msra.mxu0 0
        %1524 = vmatprep.mubr.bf16.mxu0 0
        %1525 = vmatmul.mubr.bf16.gmra.mrb[0].mxu0 %v1490
        %v1526 = vpop.f32.mrb[0].mxu0
        %v1527 = vadd.f32 0.0, %v1526
        %v1528 = vpop.f32.mrb[0].mxu0
        %v1529 = vadd.f32 0.0, %v1528
        %v1530 = vpop.f32.mrb[0].mxu0
        %v1531 = vpop.f32.mrb[0].mxu0
        %1532 = vdwg.mxu0
        %1533 = vmatprep.subr.bf16.mxu0 %v296
        %1534 = vmatpush1.bf16.msra.mxu0 %v293
        %1535 = vmatprep.subr.bf16.mxu0 0
        %1536 = vmatpush1.bf16.msra.mxu0 0
        %1537 = vmatprep.subr.bf16.mxu0 0
        %1538 = vmatpush1.bf16.msra.mxu0 0
        %1539 = vmatprep.subr.bf16.mxu0 0
        %1540 = vmatpush1.bf16.msra.mxu0 0
        %1541 = vmatprep.subr.bf16.mxu0 0
        %1542 = vmatpush1.bf16.msra.mxu0 0
        %1543 = vmatprep.subr.bf16.mxu0 0
        %1544 = vmatpush1.bf16.msra.mxu0 0
        %1545 = vmatprep.subr.bf16.mxu0 0
        %1546 = vmatpush1.bf16.msra.mxu0 0
        %1547 = vmatprep.subr.bf16.mxu0 0
        %1548 = vmatpush1.bf16.msra.mxu0 0
        %1549 = vmatprep.subr.bf16.mxu0 0
        %1550 = vmatpush1.bf16.msra.mxu0 0
        %1551 = vmatprep.subr.bf16.mxu0 0
        %1552 = vmatpush1.bf16.msra.mxu0 0
        %1553 = vmatprep.subr.bf16.mxu0 0
        %1554 = vmatpush1.bf16.msra.mxu0 0
        %1555 = vmatprep.subr.bf16.mxu0 0
        %1556 = vmatpush1.bf16.msra.mxu0 0
        %1557 = vmatprep.subr.bf16.mxu0 0
        %1558 = vmatpush1.bf16.msra.mxu0 0
        %1559 = vmatprep.subr.bf16.mxu0 0
        %1560 = vmatpush1.bf16.msra.mxu0 0
        %1561 = vmatprep.subr.bf16.mxu0 0
        %1562 = vmatpush1.bf16.msra.mxu0 0
        %1563 = vmatprep.subr.bf16.mxu0 0
        %1564 = vmatpush1.bf16.msra.mxu0 0
        %1565 = vmatprep.mubr.bf16.mxu0 0
        %1566 = vmatmul.mubr.bf16.gmra.mrb[0].mxu0 %v1490
        %v1567 = vpop.f32.mrb[0].mxu0
        %v1568 = vadd.f32 0.0, %v1567
        %v1569 = vpop.f32.mrb[0].mxu0
        %v1570 = vadd.f32 0.0, %v1569
        %v1571 = vpop.f32.mrb[0].mxu0
        %v1572 = vpop.f32.mrb[0].mxu0
        %1573 = vdwg.mxu0
        %1574 = vmatprep.subr.bf16.mxu0 %v302
        %1575 = vmatpush1.bf16.msra.mxu0 %v299
        %1576 = vmatprep.subr.bf16.mxu0 0
        %1577 = vmatpush1.bf16.msra.mxu0 0
        %1578 = vmatprep.subr.bf16.mxu0 0
        %1579 = vmatpush1.bf16.msra.mxu0 0
        %1580 = vmatprep.subr.bf16.mxu0 0
        %1581 = vmatpush1.bf16.msra.mxu0 0
        %1582 = vmatprep.subr.bf16.mxu0 0
        %1583 = vmatpush1.bf16.msra.mxu0 0
        %1584 = vmatprep.subr.bf16.mxu0 0
        %1585 = vmatpush1.bf16.msra.mxu0 0
        %1586 = vmatprep.subr.bf16.mxu0 0
        %1587 = vmatpush1.bf16.msra.mxu0 0
        %1588 = vmatprep.subr.bf16.mxu0 0
        %1589 = vmatpush1.bf16.msra.mxu0 0
        %1590 = vmatprep.subr.bf16.mxu0 0
        %1591 = vmatpush1.bf16.msra.mxu0 0
        %1592 = vmatprep.subr.bf16.mxu0 0
        %1593 = vmatpush1.bf16.msra.mxu0 0
        %1594 = vmatprep.subr.bf16.mxu0 0
        %1595 = vmatpush1.bf16.msra.mxu0 0
        %1596 = vmatprep.subr.bf16.mxu0 0
        %1597 = vmatpush1.bf16.msra.mxu0 0
        %1598 = vmatprep.subr.bf16.mxu0 0
        %1599 = vmatpush1.bf16.msra.mxu0 0
        %1600 = vmatprep.subr.bf16.mxu0 0
        %1601 = vmatpush1.bf16.msra.mxu0 0
        %1602 = vmatprep.subr.bf16.mxu0 0
        %1603 = vmatpush1.bf16.msra.mxu0 0
        %1604 = vmatprep.subr.bf16.mxu0 0
        %1605 = vmatpush1.bf16.msra.mxu0 0
        %1606 = vmatprep.mubr.bf16.mxu0 0
        %1607 = vmatmul.mubr.bf16.gmra.mrb[0].mxu0 %v1490
        %v1608 = vpop.f32.mrb[0].mxu0
        %v1609 = vadd.f32 0.0, %v1608
        %v1610 = vpop.f32.mrb[0].mxu0
        %v1611 = vadd.f32 0.0, %v1610
        %v1612 = vpop.f32.mrb[0].mxu0
        %v1613 = vpop.f32.mrb[0].mxu0
        %1614 = vdwg.mxu0
        %1615 = vmatprep.subr.bf16.mxu0 %v308
        %1616 = vmatpush1.bf16.msra.mxu0 %v305
        %1617 = vmatprep.subr.bf16.mxu0 0
        %1618 = vmatpush1.bf16.msra.mxu0 0
        %1619 = vmatprep.subr.bf16.mxu0 0
        %1620 = vmatpush1.bf16.msra.mxu0 0
        %1621 = vmatprep.subr.bf16.mxu0 0
        %1622 = vmatpush1.bf16.msra.mxu0 0
        %1623 = vmatprep.subr.bf16.mxu0 0
        %1624 = vmatpush1.bf16.msra.mxu0 0
        %1625 = vmatprep.subr.bf16.mxu0 0
        %1626 = vmatpush1.bf16.msra.mxu0 0
        %1627 = vmatprep.subr.bf16.mxu0 0
        %1628 = vmatpush1.bf16.msra.mxu0 0
        %1629 = vmatprep.subr.bf16.mxu0 0
        %1630 = vmatpush1.bf16.msra.mxu0 0
        %1631 = vmatprep.subr.bf16.mxu0 0
        %1632 = vmatpush1.bf16.msra.mxu0 0
        %1633 = vmatprep.subr.bf16.mxu0 0
        %1634 = vmatpush1.bf16.msra.mxu0 0
        %1635 = vmatprep.subr.bf16.mxu0 0
        %1636 = vmatpush1.bf16.msra.mxu0 0
        %1637 = vmatprep.subr.bf16.mxu0 0
        %1638 = vmatpush1.bf16.msra.mxu0 0
        %1639 = vmatprep.subr.bf16.mxu0 0
        %1640 = vmatpush1.bf16.msra.mxu0 0
        %1641 = vmatprep.subr.bf16.mxu0 0
        %1642 = vmatpush1.bf16.msra.mxu0 0
        %1643 = vmatprep.subr.bf16.mxu0 0
        %1644 = vmatpush1.bf16.msra.mxu0 0
        %1645 = vmatprep.subr.bf16.mxu0 0
        %1646 = vmatpush1.bf16.msra.mxu0 0
        %1647 = vmatprep.mubr.bf16.mxu0 0
        %1648 = vmatmul.mubr.bf16.gmra.mrb[0].mxu0 %v1490
        %v1649 = vpop.f32.mrb[0].mxu0
        %v1650 = vadd.f32 0.0, %v1649
        %v1651 = vpop.f32.mrb[0].mxu0
        %v1652 = vadd.f32 0.0, %v1651
        %v1653 = vpop.f32.mrb[0].mxu0
        %v1654 = vpop.f32.mrb[0].mxu0
        %1655 = vdwg.mxu0
        %1656 = vrot.lane.b32.xlu0 %v1527, 127
        %v1657 = vpop.permute.xlu0 %1656
        %1658 = vrot.lane.b32.xlu0 %v1529, 127
        %v1659 = vpop.permute.xlu0 %1658
        %1660 = vrot.lane.b32.xlu0 %v1568, 127
        %v1661 = vpop.permute.xlu0 %1660
        %1662 = vrot.lane.b32.xlu0 %v1570, 127
        %v1663 = vpop.permute.xlu0 %1662
        %1664 = vrot.lane.b32.xlu0 %v1609, 127
        %v1665 = vpop.permute.xlu0 %1664
        %1666 = vrot.lane.b32.xlu0 %v1611, 127
        %v1667 = vpop.permute.xlu0 %1666
        %1668 = vrot.lane.b32.xlu0 %v1650, 127
        %v1669 = vpop.permute.xlu0 %1668
        %1670 = vrot.lane.b32.xlu0 %v1652, 127
        %v1671 = vpop.permute.xlu0 %1670
        %vm1672 = vcmp.lt.s32.totalorder %v491, 127
        %v1673 = vsel %vm1672, %v1669, %v1671
        %v1674 = vsel %vm1672, %v1667, %v1669
        %v1675 = vsel %vm1672, %v1665, %v1667
        %v1676 = vsel %vm1672, %v1663, %v1665
        %v1677 = vsel %vm1672, %v1661, %v1663
        %v1678 = vsel %vm1672, %v1659, %v1661
        %v1679 = vsel %vm1672, %v1657, %v1659
        %v1680 = vsel %vm1672, %v1671, %v1657
        %s1681 = scalar_lea.vmem %s2, 40
        %v1682 = vld [vmem:[%s1681] sm:$0xff]
        %v1684 = vlaneseq
        %v1685 = vshrl.u32 %v1684, 7
        %v1686 = vsub.s32 0, %v1685
        %v1687 = vrot.slane %v1682, %v1686
        %v1688 = vlaneseq
        %v1689 = vshrl.u32 %v1688, 7
        %v1690 = vsub.s32 1, %v1689
        %v1691 = vrot.slane %v1682, %v1690
        %v1692 = vlaneseq
        %v1693 = vshrl.u32 %v1692, 7
        %v1694 = vsub.s32 2, %v1693
        %v1695 = vrot.slane %v1682, %v1694
        %v1696 = vlaneseq
        %v1697 = vshrl.u32 %v1696, 7
        %v1698 = vsub.s32 3, %v1697
        %v1699 = vrot.slane %v1682, %v1698
        %v1700 = vlaneseq
        %v1701 = vshrl.u32 %v1700, 7
        %v1702 = vsub.s32 4, %v1701
        %v1703 = vrot.slane %v1682, %v1702
        %v1704 = vlaneseq
        %v1705 = vshrl.u32 %v1704, 7
        %v1706 = vsub.s32 5, %v1705
        %v1707 = vrot.slane %v1682, %v1706
        %v1708 = vlaneseq
        %v1709 = vshrl.u32 %v1708, 7
        %v1710 = vsub.s32 6, %v1709
        %v1711 = vrot.slane %v1682, %v1710
        %v1712 = vlaneseq
        %v1713 = vshrl.u32 %v1712, 7
        %v1714 = vsub.s32 7, %v1713
        %v1715 = vrot.slane %v1682, %v1714
        %v1724 = vmul.f32 %v1679, %v1687
        %v1725 = vmul.f32 %v1678, %v1691
        %v1726 = vmul.f32 %v1677, %v1695
        %v1727 = vmul.f32 %v1676, %v1699
        %v1728 = vmul.f32 %v1675, %v1703
        %v1729 = vmul.f32 %v1674, %v1707
        %v1730 = vmul.f32 %v1673, %v1711
        %v1731 = vmul.f32 %v1680, %v1715
        %v1732 = vadd.f32 %v1479, %v1724
        %v1733 = vadd.f32 %v1480, %v1725
        %v1734 = vadd.f32 %v1481, %v1726
        %v1735 = vadd.f32 %v1482, %v1727
        %v1736 = vadd.f32 %v1483, %v1728
        %v1737 = vadd.f32 %v1484, %v1729
        %v1738 = vadd.f32 %v1485, %v1730
        %v1739 = vadd.f32 %v1486, %v1731
        %s1740 = scalar_lea.vmem %s1, 24
        %v1741 = vld [vmem:[%s1740] sm:$0xf]
        %v1743 = vsel %vm281, %v1741, 0
        %1745 = vmatprep.subr.bf16.mxu0 %v290
        %1746 = vmatpush1.bf16.msra.mxu0 %v287
        %1747 = vmatprep.subr.bf16.mxu0 0
        %1748 = vmatpush1.bf16.msra.mxu0 0
        %1749 = vmatprep.subr.bf16.mxu0 0
        %1750 = vmatpush1.bf16.msra.mxu0 0
        %1751 = vmatprep.subr.bf16.mxu0 0
        %1752 = vmatpush1.bf16.msra.mxu0 0
        %1753 = vmatprep.subr.bf16.mxu0 0
        %1754 = vmatpush1.bf16.msra.mxu0 0
        %1755 = vmatprep.subr.bf16.mxu0 0
        %1756 = vmatpush1.bf16.msra.mxu0 0
        %1757 = vmatprep.subr.bf16.mxu0 0
        %1758 = vmatpush1.bf16.msra.mxu0 0
        %1759 = vmatprep.subr.bf16.mxu0 0
        %1760 = vmatpush1.bf16.msra.mxu0 0
        %1761 = vmatprep.subr.bf16.mxu0 0
        %1762 = vmatpush1.bf16.msra.mxu0 0
        %1763 = vmatprep.subr.bf16.mxu0 0
        %1764 = vmatpush1.bf16.msra.mxu0 0
        %1765 = vmatprep.subr.bf16.mxu0 0
        %1766 = vmatpush1.bf16.msra.mxu0 0
        %1767 = vmatprep.subr.bf16.mxu0 0
        %1768 = vmatpush1.bf16.msra.mxu0 0
        %1769 = vmatprep.subr.bf16.mxu0 0
        %1770 = vmatpush1.bf16.msra.mxu0 0
        %1771 = vmatprep.subr.bf16.mxu0 0
        %1772 = vmatpush1.bf16.msra.mxu0 0
        %1773 = vmatprep.subr.bf16.mxu0 0
        %1774 = vmatpush1.bf16.msra.mxu0 0
        %1775 = vmatprep.subr.bf16.mxu0 0
        %1776 = vmatpush1.bf16.msra.mxu0 0
        %1777 = vmatprep.mubr.bf16.mxu0 0
        %1778 = vmatmul.mubr.bf16.gmra.mrb[0].mxu0 %v1743
        %v1779 = vpop.f32.mrb[0].mxu0
        %v1780 = vadd.f32 0.0, %v1779
        %v1781 = vpop.f32.mrb[0].mxu0
        %v1782 = vadd.f32 0.0, %v1781
        %v1783 = vpop.f32.mrb[0].mxu0
        %v1784 = vpop.f32.mrb[0].mxu0
        %1785 = vdwg.mxu0
        %1786 = vmatprep.subr.bf16.mxu0 %v296
        %1787 = vmatpush1.bf16.msra.mxu0 %v293
        %1788 = vmatprep.subr.bf16.mxu0 0
        %1789 = vmatpush1.bf16.msra.mxu0 0
        %1790 = vmatprep.subr.bf16.mxu0 0
        %1791 = vmatpush1.bf16.msra.mxu0 0
        %1792 = vmatprep.subr.bf16.mxu0 0
        %1793 = vmatpush1.bf16.msra.mxu0 0
        %1794 = vmatprep.subr.bf16.mxu0 0
        %1795 = vmatpush1.bf16.msra.mxu0 0
        %1796 = vmatprep.subr.bf16.mxu0 0
        %1797 = vmatpush1.bf16.msra.mxu0 0
        %1798 = vmatprep.subr.bf16.mxu0 0
        %1799 = vmatpush1.bf16.msra.mxu0 0
        %1800 = vmatprep.subr.bf16.mxu0 0
        %1801 = vmatpush1.bf16.msra.mxu0 0
        %1802 = vmatprep.subr.bf16.mxu0 0
        %1803 = vmatpush1.bf16.msra.mxu0 0
        %1804 = vmatprep.subr.bf16.mxu0 0
        %1805 = vmatpush1.bf16.msra.mxu0 0
        %1806 = vmatprep.subr.bf16.mxu0 0
        %1807 = vmatpush1.bf16.msra.mxu0 0
        %1808 = vmatprep.subr.bf16.mxu0 0
        %1809 = vmatpush1.bf16.msra.mxu0 0
        %1810 = vmatprep.subr.bf16.mxu0 0
        %1811 = vmatpush1.bf16.msra.mxu0 0
        %1812 = vmatprep.subr.bf16.mxu0 0
        %1813 = vmatpush1.bf16.msra.mxu0 0
        %1814 = vmatprep.subr.bf16.mxu0 0
        %1815 = vmatpush1.bf16.msra.mxu0 0
        %1816 = vmatprep.subr.bf16.mxu0 0
        %1817 = vmatpush1.bf16.msra.mxu0 0
        %1818 = vmatprep.mubr.bf16.mxu0 0
        %1819 = vmatmul.mubr.bf16.gmra.mrb[0].mxu0 %v1743
        %v1820 = vpop.f32.mrb[0].mxu0
        %v1821 = vadd.f32 0.0, %v1820
        %v1822 = vpop.f32.mrb[0].mxu0
        %v1823 = vadd.f32 0.0, %v1822
        %v1824 = vpop.f32.mrb[0].mxu0
        %v1825 = vpop.f32.mrb[0].mxu0
        %1826 = vdwg.mxu0
        %1827 = vmatprep.subr.bf16.mxu0 %v302
        %1828 = vmatpush1.bf16.msra.mxu0 %v299
        %1829 = vmatprep.subr.bf16.mxu0 0
        %1830 = vmatpush1.bf16.msra.mxu0 0
        %1831 = vmatprep.subr.bf16.mxu0 0
        %1832 = vmatpush1.bf16.msra.mxu0 0
        %1833 = vmatprep.subr.bf16.mxu0 0
        %1834 = vmatpush1.bf16.msra.mxu0 0
        %1835 = vmatprep.subr.bf16.mxu0 0
        %1836 = vmatpush1.bf16.msra.mxu0 0
        %1837 = vmatprep.subr.bf16.mxu0 0
        %1838 = vmatpush1.bf16.msra.mxu0 0
        %1839 = vmatprep.subr.bf16.mxu0 0
        %1840 = vmatpush1.bf16.msra.mxu0 0
        %1841 = vmatprep.subr.bf16.mxu0 0
        %1842 = vmatpush1.bf16.msra.mxu0 0
        %1843 = vmatprep.subr.bf16.mxu0 0
        %1844 = vmatpush1.bf16.msra.mxu0 0
        %1845 = vmatprep.subr.bf16.mxu0 0
        %1846 = vmatpush1.bf16.msra.mxu0 0
        %1847 = vmatprep.subr.bf16.mxu0 0
        %1848 = vmatpush1.bf16.msra.mxu0 0
        %1849 = vmatprep.subr.bf16.mxu0 0
        %1850 = vmatpush1.bf16.msra.mxu0 0
        %1851 = vmatprep.subr.bf16.mxu0 0
        %1852 = vmatpush1.bf16.msra.mxu0 0
        %1853 = vmatprep.subr.bf16.mxu0 0
        %1854 = vmatpush1.bf16.msra.mxu0 0
        %1855 = vmatprep.subr.bf16.mxu0 0
        %1856 = vmatpush1.bf16.msra.mxu0 0
        %1857 = vmatprep.subr.bf16.mxu0 0
        %1858 = vmatpush1.bf16.msra.mxu0 0
        %1859 = vmatprep.mubr.bf16.mxu0 0
        %1860 = vmatmul.mubr.bf16.gmra.mrb[0].mxu0 %v1743
        %v1861 = vpop.f32.mrb[0].mxu0
        %v1862 = vadd.f32 0.0, %v1861
        %v1863 = vpop.f32.mrb[0].mxu0
        %v1864 = vadd.f32 0.0, %v1863
        %v1865 = vpop.f32.mrb[0].mxu0
        %v1866 = vpop.f32.mrb[0].mxu0
        %1867 = vdwg.mxu0
        %1868 = vmatprep.subr.bf16.mxu0 %v308
        %1869 = vmatpush1.bf16.msra.mxu0 %v305
        %1870 = vmatprep.subr.bf16.mxu0 0
        %1871 = vmatpush1.bf16.msra.mxu0 0
        %1872 = vmatprep.subr.bf16.mxu0 0
        %1873 = vmatpush1.bf16.msra.mxu0 0
        %1874 = vmatprep.subr.bf16.mxu0 0
        %1875 = vmatpush1.bf16.msra.mxu0 0
        %1876 = vmatprep.subr.bf16.mxu0 0
        %1877 = vmatpush1.bf16.msra.mxu0 0
        %1878 = vmatprep.subr.bf16.mxu0 0
        %1879 = vmatpush1.bf16.msra.mxu0 0
        %1880 = vmatprep.subr.bf16.mxu0 0
        %1881 = vmatpush1.bf16.msra.mxu0 0
        %1882 = vmatprep.subr.bf16.mxu0 0
        %1883 = vmatpush1.bf16.msra.mxu0 0
        %1884 = vmatprep.subr.bf16.mxu0 0
        %1885 = vmatpush1.bf16.msra.mxu0 0
        %1886 = vmatprep.subr.bf16.mxu0 0
        %1887 = vmatpush1.bf16.msra.mxu0 0
        %1888 = vmatprep.subr.bf16.mxu0 0
        %1889 = vmatpush1.bf16.msra.mxu0 0
        %1890 = vmatprep.subr.bf16.mxu0 0
        %1891 = vmatpush1.bf16.msra.mxu0 0
        %1892 = vmatprep.subr.bf16.mxu0 0
        %1893 = vmatpush1.bf16.msra.mxu0 0
        %1894 = vmatprep.subr.bf16.mxu0 0
        %1895 = vmatpush1.bf16.msra.mxu0 0
        %1896 = vmatprep.subr.bf16.mxu0 0
        %1897 = vmatpush1.bf16.msra.mxu0 0
        %1898 = vmatprep.subr.bf16.mxu0 0
        %1899 = vmatpush1.bf16.msra.mxu0 0
        %1900 = vmatprep.mubr.bf16.mxu0 0
        %1901 = vmatmul.mubr.bf16.gmra.mrb[0].mxu0 %v1743
        %v1902 = vpop.f32.mrb[0].mxu0
        %v1903 = vadd.f32 0.0, %v1902
        %v1904 = vpop.f32.mrb[0].mxu0
        %v1905 = vadd.f32 0.0, %v1904
        %v1906 = vpop.f32.mrb[0].mxu0
        %v1907 = vpop.f32.mrb[0].mxu0
        %1908 = vdwg.mxu0
        %1909 = vrot.lane.b32.xlu0 %v1780, 97
        %v1910 = vpop.permute.xlu0 %1909
        %1911 = vrot.lane.b32.xlu0 %v1782, 97
        %v1912 = vpop.permute.xlu0 %1911
        %1913 = vrot.lane.b32.xlu0 %v1821, 97
        %v1914 = vpop.permute.xlu0 %1913
        %1915 = vrot.lane.b32.xlu0 %v1823, 97
        %v1916 = vpop.permute.xlu0 %1915
        %1917 = vrot.lane.b32.xlu0 %v1862, 97
        %v1918 = vpop.permute.xlu0 %1917
        %1919 = vrot.lane.b32.xlu0 %v1864, 97
        %v1920 = vpop.permute.xlu0 %1919
        %1921 = vrot.lane.b32.xlu0 %v1903, 97
        %v1922 = vpop.permute.xlu0 %1921
        %1923 = vrot.lane.b32.xlu0 %v1905, 97
        %v1924 = vpop.permute.xlu0 %1923
        %vm1925 = vcmp.lt.s32.totalorder %v491, 97
        %v1926 = vsel %vm1925, %v1922, %v1924
        %v1927 = vsel %vm1925, %v1920, %v1922
        %v1928 = vsel %vm1925, %v1918, %v1920
        %v1929 = vsel %vm1925, %v1916, %v1918
        %v1930 = vsel %vm1925, %v1914, %v1916
        %v1931 = vsel %vm1925, %v1912, %v1914
        %v1932 = vsel %vm1925, %v1910, %v1912
        %v1933 = vsel %vm1925, %v1924, %v1910
        %s1934 = scalar_lea.vmem %s2, 48
        %v1935 = vld [vmem:[%s1934] sm:$0xff]
        %v1937 = vlaneseq
        %v1938 = vshrl.u32 %v1937, 7
        %v1939 = vsub.s32 0, %v1938
        %v1940 = vrot.slane %v1935, %v1939
        %v1941 = vlaneseq
        %v1942 = vshrl.u32 %v1941, 7
        %v1943 = vsub.s32 1, %v1942
        %v1944 = vrot.slane %v1935, %v1943
        %v1945 = vlaneseq
        %v1946 = vshrl.u32 %v1945, 7
        %v1947 = vsub.s32 2, %v1946
        %v1948 = vrot.slane %v1935, %v1947
        %v1949 = vlaneseq
        %v1950 = vshrl.u32 %v1949, 7
        %v1951 = vsub.s32 3, %v1950
        %v1952 = vrot.slane %v1935, %v1951
        %v1953 = vlaneseq
        %v1954 = vshrl.u32 %v1953, 7
        %v1955 = vsub.s32 4, %v1954
        %v1956 = vrot.slane %v1935, %v1955
        %v1957 = vlaneseq
        %v1958 = vshrl.u32 %v1957, 7
        %v1959 = vsub.s32 5, %v1958
        %v1960 = vrot.slane %v1935, %v1959
        %v1961 = vlaneseq
        %v1962 = vshrl.u32 %v1961, 7
        %v1963 = vsub.s32 6, %v1962
        %v1964 = vrot.slane %v1935, %v1963
        %v1965 = vlaneseq
        %v1966 = vshrl.u32 %v1965, 7
        %v1967 = vsub.s32 7, %v1966
        %v1968 = vrot.slane %v1935, %v1967
        %v1977 = vmul.f32 %v1932, %v1940
        %v1978 = vmul.f32 %v1931, %v1944
        %v1979 = vmul.f32 %v1930, %v1948
        %v1980 = vmul.f32 %v1929, %v1952
        %v1981 = vmul.f32 %v1928, %v1956
        %v1982 = vmul.f32 %v1927, %v1960
        %v1983 = vmul.f32 %v1926, %v1964
        %v1984 = vmul.f32 %v1933, %v1968
        %v1985 = vadd.f32 %v1732, %v1977
        %v1986 = vadd.f32 %v1733, %v1978
        %v1987 = vadd.f32 %v1734, %v1979
        %v1988 = vadd.f32 %v1735, %v1980
        %v1989 = vadd.f32 %v1736, %v1981
        %v1990 = vadd.f32 %v1737, %v1982
        %v1991 = vadd.f32 %v1738, %v1983
        %v1992 = vadd.f32 %v1739, %v1984
        %s1993 = scalar_lea.vmem %s1, 28
        %v1994 = vld [vmem:[%s1993] sm:$0xf]
        %v1996 = vsel %vm281, %v1994, 0
        %1998 = vmatprep.subr.bf16.mxu0 %v290
        %1999 = vmatpush1.bf16.msra.mxu0 %v287
        %2000 = vmatprep.subr.bf16.mxu0 0
        %2001 = vmatpush1.bf16.msra.mxu0 0
        %2002 = vmatprep.subr.bf16.mxu0 0
        %2003 = vmatpush1.bf16.msra.mxu0 0
        %2004 = vmatprep.subr.bf16.mxu0 0
        %2005 = vmatpush1.bf16.msra.mxu0 0
        %2006 = vmatprep.subr.bf16.mxu0 0
        %2007 = vmatpush1.bf16.msra.mxu0 0
        %2008 = vmatprep.subr.bf16.mxu0 0
        %2009 = vmatpush1.bf16.msra.mxu0 0
        %2010 = vmatprep.subr.bf16.mxu0 0
        %2011 = vmatpush1.bf16.msra.mxu0 0
        %2012 = vmatprep.subr.bf16.mxu0 0
        %2013 = vmatpush1.bf16.msra.mxu0 0
        %2014 = vmatprep.subr.bf16.mxu0 0
        %2015 = vmatpush1.bf16.msra.mxu0 0
        %2016 = vmatprep.subr.bf16.mxu0 0
        %2017 = vmatpush1.bf16.msra.mxu0 0
        %2018 = vmatprep.subr.bf16.mxu0 0
        %2019 = vmatpush1.bf16.msra.mxu0 0
        %2020 = vmatprep.subr.bf16.mxu0 0
        %2021 = vmatpush1.bf16.msra.mxu0 0
        %2022 = vmatprep.subr.bf16.mxu0 0
        %2023 = vmatpush1.bf16.msra.mxu0 0
        %2024 = vmatprep.subr.bf16.mxu0 0
        %2025 = vmatpush1.bf16.msra.mxu0 0
        %2026 = vmatprep.subr.bf16.mxu0 0
        %2027 = vmatpush1.bf16.msra.mxu0 0
        %2028 = vmatprep.subr.bf16.mxu0 0
        %2029 = vmatpush1.bf16.msra.mxu0 0
        %2030 = vmatprep.mubr.bf16.mxu0 0
        %2031 = vmatmul.mubr.bf16.gmra.mrb[0].mxu0 %v1996
        %v2032 = vpop.f32.mrb[0].mxu0
        %v2033 = vadd.f32 0.0, %v2032
        %v2034 = vpop.f32.mrb[0].mxu0
        %v2035 = vadd.f32 0.0, %v2034
        %v2036 = vpop.f32.mrb[0].mxu0
        %v2037 = vpop.f32.mrb[0].mxu0
        %2038 = vdwg.mxu0
        %2039 = vmatprep.subr.bf16.mxu0 %v296
        %2040 = vmatpush1.bf16.msra.mxu0 %v293
        %2041 = vmatprep.subr.bf16.mxu0 0
        %2042 = vmatpush1.bf16.msra.mxu0 0
        %2043 = vmatprep.subr.bf16.mxu0 0
        %2044 = vmatpush1.bf16.msra.mxu0 0
        %2045 = vmatprep.subr.bf16.mxu0 0
        %2046 = vmatpush1.bf16.msra.mxu0 0
        %2047 = vmatprep.subr.bf16.mxu0 0
        %2048 = vmatpush1.bf16.msra.mxu0 0
        %2049 = vmatprep.subr.bf16.mxu0 0
        %2050 = vmatpush1.bf16.msra.mxu0 0
        %2051 = vmatprep.subr.bf16.mxu0 0
        %2052 = vmatpush1.bf16.msra.mxu0 0
        %2053 = vmatprep.subr.bf16.mxu0 0
        %2054 = vmatpush1.bf16.msra.mxu0 0
        %2055 = vmatprep.subr.bf16.mxu0 0
        %2056 = vmatpush1.bf16.msra.mxu0 0
        %2057 = vmatprep.subr.bf16.mxu0 0
        %2058 = vmatpush1.bf16.msra.mxu0 0
        %2059 = vmatprep.subr.bf16.mxu0 0
        %2060 = vmatpush1.bf16.msra.mxu0 0
        %2061 = vmatprep.subr.bf16.mxu0 0
        %2062 = vmatpush1.bf16.msra.mxu0 0
        %2063 = vmatprep.subr.bf16.mxu0 0
        %2064 = vmatpush1.bf16.msra.mxu0 0
        %2065 = vmatprep.subr.bf16.mxu0 0
        %2066 = vmatpush1.bf16.msra.mxu0 0
        %2067 = vmatprep.subr.bf16.mxu0 0
        %2068 = vmatpush1.bf16.msra.mxu0 0
        %2069 = vmatprep.subr.bf16.mxu0 0
        %2070 = vmatpush1.bf16.msra.mxu0 0
        %2071 = vmatprep.mubr.bf16.mxu0 0
        %2072 = vmatmul.mubr.bf16.gmra.mrb[0].mxu0 %v1996
        %v2073 = vpop.f32.mrb[0].mxu0
        %v2074 = vadd.f32 0.0, %v2073
        %v2075 = vpop.f32.mrb[0].mxu0
        %v2076 = vadd.f32 0.0, %v2075
        %v2077 = vpop.f32.mrb[0].mxu0
        %v2078 = vpop.f32.mrb[0].mxu0
        %2079 = vdwg.mxu0
        %2080 = vmatprep.subr.bf16.mxu0 %v302
        %2081 = vmatpush1.bf16.msra.mxu0 %v299
        %2082 = vmatprep.subr.bf16.mxu0 0
        %2083 = vmatpush1.bf16.msra.mxu0 0
        %2084 = vmatprep.subr.bf16.mxu0 0
        %2085 = vmatpush1.bf16.msra.mxu0 0
        %2086 = vmatprep.subr.bf16.mxu0 0
        %2087 = vmatpush1.bf16.msra.mxu0 0
        %2088 = vmatprep.subr.bf16.mxu0 0
        %2089 = vmatpush1.bf16.msra.mxu0 0
        %2090 = vmatprep.subr.bf16.mxu0 0
        %2091 = vmatpush1.bf16.msra.mxu0 0
        %2092 = vmatprep.subr.bf16.mxu0 0
        %2093 = vmatpush1.bf16.msra.mxu0 0
        %2094 = vmatprep.subr.bf16.mxu0 0
        %2095 = vmatpush1.bf16.msra.mxu0 0
        %2096 = vmatprep.subr.bf16.mxu0 0
        %2097 = vmatpush1.bf16.msra.mxu0 0
        %2098 = vmatprep.subr.bf16.mxu0 0
        %2099 = vmatpush1.bf16.msra.mxu0 0
        %2100 = vmatprep.subr.bf16.mxu0 0
        %2101 = vmatpush1.bf16.msra.mxu0 0
        %2102 = vmatprep.subr.bf16.mxu0 0
        %2103 = vmatpush1.bf16.msra.mxu0 0
        %2104 = vmatprep.subr.bf16.mxu0 0
        %2105 = vmatpush1.bf16.msra.mxu0 0
        %2106 = vmatprep.subr.bf16.mxu0 0
        %2107 = vmatpush1.bf16.msra.mxu0 0
        %2108 = vmatprep.subr.bf16.mxu0 0
        %2109 = vmatpush1.bf16.msra.mxu0 0
        %2110 = vmatprep.subr.bf16.mxu0 0
        %2111 = vmatpush1.bf16.msra.mxu0 0
        %2112 = vmatprep.mubr.bf16.mxu0 0
        %2113 = vmatmul.mubr.bf16.gmra.mrb[0].mxu0 %v1996
        %v2114 = vpop.f32.mrb[0].mxu0
        %v2115 = vadd.f32 0.0, %v2114
        %v2116 = vpop.f32.mrb[0].mxu0
        %v2117 = vadd.f32 0.0, %v2116
        %v2118 = vpop.f32.mrb[0].mxu0
        %v2119 = vpop.f32.mrb[0].mxu0
        %2120 = vdwg.mxu0
        %2121 = vmatprep.subr.bf16.mxu0 %v308
        %2122 = vmatpush1.bf16.msra.mxu0 %v305
        %2123 = vmatprep.subr.bf16.mxu0 0
        %2124 = vmatpush1.bf16.msra.mxu0 0
        %2125 = vmatprep.subr.bf16.mxu0 0
        %2126 = vmatpush1.bf16.msra.mxu0 0
        %2127 = vmatprep.subr.bf16.mxu0 0
        %2128 = vmatpush1.bf16.msra.mxu0 0
        %2129 = vmatprep.subr.bf16.mxu0 0
        %2130 = vmatpush1.bf16.msra.mxu0 0
        %2131 = vmatprep.subr.bf16.mxu0 0
        %2132 = vmatpush1.bf16.msra.mxu0 0
        %2133 = vmatprep.subr.bf16.mxu0 0
        %2134 = vmatpush1.bf16.msra.mxu0 0
        %2135 = vmatprep.subr.bf16.mxu0 0
        %2136 = vmatpush1.bf16.msra.mxu0 0
        %2137 = vmatprep.subr.bf16.mxu0 0
        %2138 = vmatpush1.bf16.msra.mxu0 0
        %2139 = vmatprep.subr.bf16.mxu0 0
        %2140 = vmatpush1.bf16.msra.mxu0 0
        %2141 = vmatprep.subr.bf16.mxu0 0
        %2142 = vmatpush1.bf16.msra.mxu0 0
        %2143 = vmatprep.subr.bf16.mxu0 0
        %2144 = vmatpush1.bf16.msra.mxu0 0
        %2145 = vmatprep.subr.bf16.mxu0 0
        %2146 = vmatpush1.bf16.msra.mxu0 0
        %2147 = vmatprep.subr.bf16.mxu0 0
        %2148 = vmatpush1.bf16.msra.mxu0 0
        %2149 = vmatprep.subr.bf16.mxu0 0
        %2150 = vmatpush1.bf16.msra.mxu0 0
        %2151 = vmatprep.subr.bf16.mxu0 0
        %2152 = vmatpush1.bf16.msra.mxu0 0
        %2153 = vmatprep.mubr.bf16.mxu0 0
        %2154 = vmatmul.mubr.bf16.gmra.mrb[0].mxu0 %v1996
        %v2155 = vpop.f32.mrb[0].mxu0
        %v2156 = vadd.f32 0.0, %v2155
        %v2157 = vpop.f32.mrb[0].mxu0
        %v2158 = vadd.f32 0.0, %v2157
        %v2159 = vpop.f32.mrb[0].mxu0
        %v2160 = vpop.f32.mrb[0].mxu0
        %2161 = vdwg.mxu0
        %2162 = vrot.lane.b32.xlu0 %v2033, 96
        %v2163 = vpop.permute.xlu0 %2162
        %2164 = vrot.lane.b32.xlu0 %v2035, 96
        %v2165 = vpop.permute.xlu0 %2164
        %2166 = vrot.lane.b32.xlu0 %v2074, 96
        %v2167 = vpop.permute.xlu0 %2166
        %2168 = vrot.lane.b32.xlu0 %v2076, 96
        %v2169 = vpop.permute.xlu0 %2168
        %2170 = vrot.lane.b32.xlu0 %v2115, 96
        %v2171 = vpop.permute.xlu0 %2170
        %2172 = vrot.lane.b32.xlu0 %v2117, 96
        %v2173 = vpop.permute.xlu0 %2172
        %2174 = vrot.lane.b32.xlu0 %v2156, 96
        %v2175 = vpop.permute.xlu0 %2174
        %2176 = vrot.lane.b32.xlu0 %v2158, 96
        %v2177 = vpop.permute.xlu0 %2176
        %vm2178 = vcmp.lt.s32.totalorder %v491, 96
        %v2179 = vsel %vm2178, %v2175, %v2177
        %v2180 = vsel %vm2178, %v2173, %v2175
        %v2181 = vsel %vm2178, %v2171, %v2173
        %v2182 = vsel %vm2178, %v2169, %v2171
        %v2183 = vsel %vm2178, %v2167, %v2169
        %v2184 = vsel %vm2178, %v2165, %v2167
        %v2185 = vsel %vm2178, %v2163, %v2165
        %v2186 = vsel %vm2178, %v2177, %v2163
        %s2187 = scalar_lea.vmem %s2, 56
        %v2188 = vld [vmem:[%s2187] sm:$0xff]
        %v2190 = vlaneseq
        %v2191 = vshrl.u32 %v2190, 7
        %v2192 = vsub.s32 0, %v2191
        %v2193 = vrot.slane %v2188, %v2192
        %v2194 = vlaneseq
        %v2195 = vshrl.u32 %v2194, 7
        %v2196 = vsub.s32 1, %v2195
        %v2197 = vrot.slane %v2188, %v2196
        %v2198 = vlaneseq
        %v2199 = vshrl.u32 %v2198, 7
        %v2200 = vsub.s32 2, %v2199
        %v2201 = vrot.slane %v2188, %v2200
        %v2202 = vlaneseq
        %v2203 = vshrl.u32 %v2202, 7
        %v2204 = vsub.s32 3, %v2203
        %v2205 = vrot.slane %v2188, %v2204
        %v2206 = vlaneseq
        %v2207 = vshrl.u32 %v2206, 7
        %v2208 = vsub.s32 4, %v2207
        %v2209 = vrot.slane %v2188, %v2208
        %v2210 = vlaneseq
        %v2211 = vshrl.u32 %v2210, 7
        %v2212 = vsub.s32 5, %v2211
        %v2213 = vrot.slane %v2188, %v2212
        %v2214 = vlaneseq
        %v2215 = vshrl.u32 %v2214, 7
        %v2216 = vsub.s32 6, %v2215
        %v2217 = vrot.slane %v2188, %v2216
        %v2218 = vlaneseq
        %v2219 = vshrl.u32 %v2218, 7
        %v2220 = vsub.s32 7, %v2219
        %v2221 = vrot.slane %v2188, %v2220
        %v2230 = vmul.f32 %v2185, %v2193
        %v2231 = vmul.f32 %v2184, %v2197
        %v2232 = vmul.f32 %v2183, %v2201
        %v2233 = vmul.f32 %v2182, %v2205
        %v2234 = vmul.f32 %v2181, %v2209
        %v2235 = vmul.f32 %v2180, %v2213
        %v2236 = vmul.f32 %v2179, %v2217
        %v2237 = vmul.f32 %v2186, %v2221
        %v2238 = vadd.f32 %v1985, %v2230
        %v2239 = vadd.f32 %v1986, %v2231
        %v2240 = vadd.f32 %v1987, %v2232
        %v2241 = vadd.f32 %v1988, %v2233
        %v2242 = vadd.f32 %v1989, %v2234
        %v2243 = vadd.f32 %v1990, %v2235
        %v2244 = vadd.f32 %v1991, %v2236
        %v2245 = vadd.f32 %v1992, %v2237
        %s2246 = scalar_lea.vmem %s1, 32
        %v2247 = vld [vmem:[%s2246] sm:$0xf]
        %v2249 = vsel %vm281, %v2247, 0
        %2251 = vmatprep.subr.bf16.mxu0 %v290
        %2252 = vmatpush1.bf16.msra.mxu0 %v287
        %2253 = vmatprep.subr.bf16.mxu0 0
        %2254 = vmatpush1.bf16.msra.mxu0 0
        %2255 = vmatprep.subr.bf16.mxu0 0
        %2256 = vmatpush1.bf16.msra.mxu0 0
        %2257 = vmatprep.subr.bf16.mxu0 0
        %2258 = vmatpush1.bf16.msra.mxu0 0
        %2259 = vmatprep.subr.bf16.mxu0 0
        %2260 = vmatpush1.bf16.msra.mxu0 0
        %2261 = vmatprep.subr.bf16.mxu0 0
        %2262 = vmatpush1.bf16.msra.mxu0 0
        %2263 = vmatprep.subr.bf16.mxu0 0
        %2264 = vmatpush1.bf16.msra.mxu0 0
        %2265 = vmatprep.subr.bf16.mxu0 0
        %2266 = vmatpush1.bf16.msra.mxu0 0
        %2267 = vmatprep.subr.bf16.mxu0 0
        %2268 = vmatpush1.bf16.msra.mxu0 0
        %2269 = vmatprep.subr.bf16.mxu0 0
        %2270 = vmatpush1.bf16.msra.mxu0 0
        %2271 = vmatprep.subr.bf16.mxu0 0
        %2272 = vmatpush1.bf16.msra.mxu0 0
        %2273 = vmatprep.subr.bf16.mxu0 0
        %2274 = vmatpush1.bf16.msra.mxu0 0
        %2275 = vmatprep.subr.bf16.mxu0 0
        %2276 = vmatpush1.bf16.msra.mxu0 0
        %2277 = vmatprep.subr.bf16.mxu0 0
        %2278 = vmatpush1.bf16.msra.mxu0 0
        %2279 = vmatprep.subr.bf16.mxu0 0
        %2280 = vmatpush1.bf16.msra.mxu0 0
        %2281 = vmatprep.subr.bf16.mxu0 0
        %2282 = vmatpush1.bf16.msra.mxu0 0
        %2283 = vmatprep.mubr.bf16.mxu0 0
        %2284 = vmatmul.mubr.bf16.gmra.mrb[0].mxu0 %v2249
        %v2285 = vpop.f32.mrb[0].mxu0
        %v2286 = vadd.f32 0.0, %v2285
        %v2287 = vpop.f32.mrb[0].mxu0
        %v2288 = vadd.f32 0.0, %v2287
        %v2289 = vpop.f32.mrb[0].mxu0
        %v2290 = vpop.f32.mrb[0].mxu0
        %2291 = vdwg.mxu0
        %2292 = vmatprep.subr.bf16.mxu0 %v296
        %2293 = vmatpush1.bf16.msra.mxu0 %v293
        %2294 = vmatprep.subr.bf16.mxu0 0
        %2295 = vmatpush1.bf16.msra.mxu0 0
        %2296 = vmatprep.subr.bf16.mxu0 0
        %2297 = vmatpush1.bf16.msra.mxu0 0
        %2298 = vmatprep.subr.bf16.mxu0 0
        %2299 = vmatpush1.bf16.msra.mxu0 0
        %2300 = vmatprep.subr.bf16.mxu0 0
        %2301 = vmatpush1.bf16.msra.mxu0 0
        %2302 = vmatprep.subr.bf16.mxu0 0
        %2303 = vmatpush1.bf16.msra.mxu0 0
        %2304 = vmatprep.subr.bf16.mxu0 0
        %2305 = vmatpush1.bf16.msra.mxu0 0
        %2306 = vmatprep.subr.bf16.mxu0 0
        %2307 = vmatpush1.bf16.msra.mxu0 0
        %2308 = vmatprep.subr.bf16.mxu0 0
        %2309 = vmatpush1.bf16.msra.mxu0 0
        %2310 = vmatprep.subr.bf16.mxu0 0
        %2311 = vmatpush1.bf16.msra.mxu0 0
        %2312 = vmatprep.subr.bf16.mxu0 0
        %2313 = vmatpush1.bf16.msra.mxu0 0
        %2314 = vmatprep.subr.bf16.mxu0 0
        %2315 = vmatpush1.bf16.msra.mxu0 0
        %2316 = vmatprep.subr.bf16.mxu0 0
        %2317 = vmatpush1.bf16.msra.mxu0 0
        %2318 = vmatprep.subr.bf16.mxu0 0
        %2319 = vmatpush1.bf16.msra.mxu0 0
        %2320 = vmatprep.subr.bf16.mxu0 0
        %2321 = vmatpush1.bf16.msra.mxu0 0
        %2322 = vmatprep.subr.bf16.mxu0 0
        %2323 = vmatpush1.bf16.msra.mxu0 0
        %2324 = vmatprep.mubr.bf16.mxu0 0
        %2325 = vmatmul.mubr.bf16.gmra.mrb[0].mxu0 %v2249
        %v2326 = vpop.f32.mrb[0].mxu0
        %v2327 = vadd.f32 0.0, %v2326
        %v2328 = vpop.f32.mrb[0].mxu0
        %v2329 = vadd.f32 0.0, %v2328
        %v2330 = vpop.f32.mrb[0].mxu0
        %v2331 = vpop.f32.mrb[0].mxu0
        %2332 = vdwg.mxu0
        %2333 = vmatprep.subr.bf16.mxu0 %v302
        %2334 = vmatpush1.bf16.msra.mxu0 %v299
        %2335 = vmatprep.subr.bf16.mxu0 0
        %2336 = vmatpush1.bf16.msra.mxu0 0
        %2337 = vmatprep.subr.bf16.mxu0 0
        %2338 = vmatpush1.bf16.msra.mxu0 0
        %2339 = vmatprep.subr.bf16.mxu0 0
        %2340 = vmatpush1.bf16.msra.mxu0 0
        %2341 = vmatprep.subr.bf16.mxu0 0
        %2342 = vmatpush1.bf16.msra.mxu0 0
        %2343 = vmatprep.subr.bf16.mxu0 0
        %2344 = vmatpush1.bf16.msra.mxu0 0
        %2345 = vmatprep.subr.bf16.mxu0 0
        %2346 = vmatpush1.bf16.msra.mxu0 0
        %2347 = vmatprep.subr.bf16.mxu0 0
        %2348 = vmatpush1.bf16.msra.mxu0 0
        %2349 = vmatprep.subr.bf16.mxu0 0
        %2350 = vmatpush1.bf16.msra.mxu0 0
        %2351 = vmatprep.subr.bf16.mxu0 0
        %2352 = vmatpush1.bf16.msra.mxu0 0
        %2353 = vmatprep.subr.bf16.mxu0 0
        %2354 = vmatpush1.bf16.msra.mxu0 0
        %2355 = vmatprep.subr.bf16.mxu0 0
        %2356 = vmatpush1.bf16.msra.mxu0 0
        %2357 = vmatprep.subr.bf16.mxu0 0
        %2358 = vmatpush1.bf16.msra.mxu0 0
        %2359 = vmatprep.subr.bf16.mxu0 0
        %2360 = vmatpush1.bf16.msra.mxu0 0
        %2361 = vmatprep.subr.bf16.mxu0 0
        %2362 = vmatpush1.bf16.msra.mxu0 0
        %2363 = vmatprep.subr.bf16.mxu0 0
        %2364 = vmatpush1.bf16.msra.mxu0 0
        %2365 = vmatprep.mubr.bf16.mxu0 0
        %2366 = vmatmul.mubr.bf16.gmra.mrb[0].mxu0 %v2249
        %v2367 = vpop.f32.mrb[0].mxu0
        %v2368 = vadd.f32 0.0, %v2367
        %v2369 = vpop.f32.mrb[0].mxu0
        %v2370 = vadd.f32 0.0, %v2369
        %v2371 = vpop.f32.mrb[0].mxu0
        %v2372 = vpop.f32.mrb[0].mxu0
        %2373 = vdwg.mxu0
        %2374 = vmatprep.subr.bf16.mxu0 %v308
        %2375 = vmatpush1.bf16.msra.mxu0 %v305
        %2376 = vmatprep.subr.bf16.mxu0 0
        %2377 = vmatpush1.bf16.msra.mxu0 0
        %2378 = vmatprep.subr.bf16.mxu0 0
        %2379 = vmatpush1.bf16.msra.mxu0 0
        %2380 = vmatprep.subr.bf16.mxu0 0
        %2381 = vmatpush1.bf16.msra.mxu0 0
        %2382 = vmatprep.subr.bf16.mxu0 0
        %2383 = vmatpush1.bf16.msra.mxu0 0
        %2384 = vmatprep.subr.bf16.mxu0 0
        %2385 = vmatpush1.bf16.msra.mxu0 0
        %2386 = vmatprep.subr.bf16.mxu0 0
        %2387 = vmatpush1.bf16.msra.mxu0 0
        %2388 = vmatprep.subr.bf16.mxu0 0
        %2389 = vmatpush1.bf16.msra.mxu0 0
        %2390 = vmatprep.subr.bf16.mxu0 0
        %2391 = vmatpush1.bf16.msra.mxu0 0
        %2392 = vmatprep.subr.bf16.mxu0 0
        %2393 = vmatpush1.bf16.msra.mxu0 0
        %2394 = vmatprep.subr.bf16.mxu0 0
        %2395 = vmatpush1.bf16.msra.mxu0 0
        %2396 = vmatprep.subr.bf16.mxu0 0
        %2397 = vmatpush1.bf16.msra.mxu0 0
        %2398 = vmatprep.subr.bf16.mxu0 0
        %2399 = vmatpush1.bf16.msra.mxu0 0
        %2400 = vmatprep.subr.bf16.mxu0 0
        %2401 = vmatpush1.bf16.msra.mxu0 0
        %2402 = vmatprep.subr.bf16.mxu0 0
        %2403 = vmatpush1.bf16.msra.mxu0 0
        %2404 = vmatprep.subr.bf16.mxu0 0
        %2405 = vmatpush1.bf16.msra.mxu0 0
        %2406 = vmatprep.mubr.bf16.mxu0 0
        %2407 = vmatmul.mubr.bf16.gmra.mrb[0].mxu0 %v2249
        %v2408 = vpop.f32.mrb[0].mxu0
        %v2409 = vadd.f32 0.0, %v2408
        %v2410 = vpop.f32.mrb[0].mxu0
        %v2411 = vadd.f32 0.0, %v2410
        %v2412 = vpop.f32.mrb[0].mxu0
        %v2413 = vpop.f32.mrb[0].mxu0
        %2414 = vdwg.mxu0
        %2415 = vrot.lane.b32.xlu0 %v2286, 95
        %v2416 = vpop.permute.xlu0 %2415
        %2417 = vrot.lane.b32.xlu0 %v2288, 95
        %v2418 = vpop.permute.xlu0 %2417
        %2419 = vrot.lane.b32.xlu0 %v2327, 95
        %v2420 = vpop.permute.xlu0 %2419
        %2421 = vrot.lane.b32.xlu0 %v2329, 95
        %v2422 = vpop.permute.xlu0 %2421
        %2423 = vrot.lane.b32.xlu0 %v2368, 95
        %v2424 = vpop.permute.xlu0 %2423
        %2425 = vrot.lane.b32.xlu0 %v2370, 95
        %v2426 = vpop.permute.xlu0 %2425
        %2427 = vrot.lane.b32.xlu0 %v2409, 95
        %v2428 = vpop.permute.xlu0 %2427
        %2429 = vrot.lane.b32.xlu0 %v2411, 95
        %v2430 = vpop.permute.xlu0 %2429
        %vm2431 = vcmp.lt.s32.totalorder %v491, 95
        %v2432 = vsel %vm2431, %v2428, %v2430
        %v2433 = vsel %vm2431, %v2426, %v2428
        %v2434 = vsel %vm2431, %v2424, %v2426
        %v2435 = vsel %vm2431, %v2422, %v2424
        %v2436 = vsel %vm2431, %v2420, %v2422
        %v2437 = vsel %vm2431, %v2418, %v2420
        %v2438 = vsel %vm2431, %v2416, %v2418
        %v2439 = vsel %vm2431, %v2430, %v2416
        %s2440 = scalar_lea.vmem %s2, 64
        %v2441 = vld [vmem:[%s2440] sm:$0xff]
        %v2443 = vlaneseq
        %v2444 = vshrl.u32 %v2443, 7
        %v2445 = vsub.s32 0, %v2444
        %v2446 = vrot.slane %v2441, %v2445
        %v2447 = vlaneseq
        %v2448 = vshrl.u32 %v2447, 7
        %v2449 = vsub.s32 1, %v2448
        %v2450 = vrot.slane %v2441, %v2449
        %v2451 = vlaneseq
        %v2452 = vshrl.u32 %v2451, 7
        %v2453 = vsub.s32 2, %v2452
        %v2454 = vrot.slane %v2441, %v2453
        %v2455 = vlaneseq
        %v2456 = vshrl.u32 %v2455, 7
        %v2457 = vsub.s32 3, %v2456
        %v2458 = vrot.slane %v2441, %v2457
        %v2459 = vlaneseq
        %v2460 = vshrl.u32 %v2459, 7
        %v2461 = vsub.s32 4, %v2460
        %v2462 = vrot.slane %v2441, %v2461
        %v2463 = vlaneseq
        %v2464 = vshrl.u32 %v2463, 7
        %v2465 = vsub.s32 5, %v2464
        %v2466 = vrot.slane %v2441, %v2465
        %v2467 = vlaneseq
        %v2468 = vshrl.u32 %v2467, 7
        %v2469 = vsub.s32 6, %v2468
        %v2470 = vrot.slane %v2441, %v2469
        %v2471 = vlaneseq
        %v2472 = vshrl.u32 %v2471, 7
        %v2473 = vsub.s32 7, %v2472
        %v2474 = vrot.slane %v2441, %v2473
        %v2483 = vmul.f32 %v2438, %v2446
        %v2484 = vmul.f32 %v2437, %v2450
        %v2485 = vmul.f32 %v2436, %v2454
        %v2486 = vmul.f32 %v2435, %v2458
        %v2487 = vmul.f32 %v2434, %v2462
        %v2488 = vmul.f32 %v2433, %v2466
        %v2489 = vmul.f32 %v2432, %v2470
        %v2490 = vmul.f32 %v2439, %v2474
        %v2491 = vadd.f32 %v2238, %v2483
        %v2492 = vadd.f32 %v2239, %v2484
        %v2493 = vadd.f32 %v2240, %v2485
        %v2494 = vadd.f32 %v2241, %v2486
        %v2495 = vadd.f32 %v2242, %v2487
        %v2496 = vadd.f32 %v2243, %v2488
        %v2497 = vadd.f32 %v2244, %v2489
        %v2498 = vadd.f32 %v2245, %v2490
        %v2499 = vadd.f32 %v2491, %v2492
        %v2500 = vadd.f32 %v2499, %v2493
        %v2501 = vadd.f32 %v2500, %v2494
        %v2502 = vadd.f32 %v2501, %v2495
        %v2503 = vadd.f32 %v2502, %v2496
        %v2504 = vadd.f32 %v2503, %v2497
        %v2505 = vadd.f32 %v2504, %v2498
        %2506 = vadd.xlane.f32.xlu0 %v2505
        %v2507 = vpop.xlane.xlu0 %2506
        %v2508 = vmul.f32 %v2491, %v2491
        %v2509 = vmul.f32 %v2492, %v2492
        %v2510 = vmul.f32 %v2493, %v2493
        %v2511 = vmul.f32 %v2494, %v2494
        %v2512 = vmul.f32 %v2495, %v2495
        %v2513 = vmul.f32 %v2496, %v2496
        %v2514 = vmul.f32 %v2497, %v2497
        %v2515 = vmul.f32 %v2498, %v2498
        %v2516 = vadd.f32 %v2508, %v2509
        %v2517 = vadd.f32 %v2516, %v2510
        %v2518 = vadd.f32 %v2517, %v2511
        %v2519 = vadd.f32 %v2518, %v2512
        %v2520 = vadd.f32 %v2519, %v2513
        %v2521 = vadd.f32 %v2520, %v2514
        %v2522 = vadd.f32 %v2521, %v2515
        %2523 = vadd.xlane.f32.xlu0 %v2522
        %v2524 = vpop.xlane.xlu0 %2523
        %v2525 = vmul.f32 %v2507, 0.0009765625
        %v2526 = vmul.f32 %v2524, 0.0009765625
        %v2527 = vmul.f32 %v2525, %v2525
        %v2528 = vsub.f32 %v2526, %v2527
        %v2529 = vmax.f32 %v2528, 0.0
        %v2530 = vld [vmem:[%s3] sm:$0xff]
        %v2531 = vadd.f32 %v2529, 1e-05
        %v2532 = vrsqrt.pop %v2531
        %v2533 = vmul.f32 %v2530, %v2532
        %v2534 = vld [vmem:[%s4] sm:$0xff]
        %v2535 = vmul.f32 %v2525, %v2533
        %v2536 = vsub.f32 %v2534, %v2535
        %2538 = vset.pattern.permute.xlu0 0
        %2539 = vperm.xlu0 %2538, %v2533
        %v2540 = vpop.permute.xlu0 %2539
        %v2542 = vmul.f32 %v2491, %v2540
        %v2543 = vmul.f32 %v2492, %v2540
        %v2544 = vmul.f32 %v2493, %v2540
        %v2545 = vmul.f32 %v2494, %v2540
        %v2546 = vmul.f32 %v2495, %v2540
        %v2547 = vmul.f32 %v2496, %v2540
        %v2548 = vmul.f32 %v2497, %v2540
        %v2549 = vmul.f32 %v2498, %v2540
        %2551 = vset.pattern.permute.xlu0 0
        %2552 = vperm.xlu0 %2551, %v2536
        %v2553 = vpop.permute.xlu0 %2552
        %v2555 = vadd.f32 %v2542, %v2553
        %v2556 = vadd.f32 %v2543, %v2553
        %v2557 = vadd.f32 %v2544, %v2553
        %v2558 = vadd.f32 %v2545, %v2553
        %v2559 = vadd.f32 %v2546, %v2553
        %v2560 = vadd.f32 %v2547, %v2553
        %v2561 = vadd.f32 %v2548, %v2553
        %v2562 = vadd.f32 %v2549, %v2553
        %vm2563 = vcmp.ge.f32.partialorder %v2555, 0.0
        %vm2564 = vcmp.ge.f32.partialorder %v2556, 0.0
        %vm2565 = vcmp.ge.f32.partialorder %v2557, 0.0
        %vm2566 = vcmp.ge.f32.partialorder %v2558, 0.0
        %vm2567 = vcmp.ge.f32.partialorder %v2559, 0.0
        %vm2568 = vcmp.ge.f32.partialorder %v2560, 0.0
        %vm2569 = vcmp.ge.f32.partialorder %v2561, 0.0
        %vm2570 = vcmp.ge.f32.partialorder %v2562, 0.0
        %v2571 = vmul.f32 %v2555, 0.2
        %v2572 = vmul.f32 %v2556, 0.2
        %v2573 = vmul.f32 %v2557, 0.2
        %v2574 = vmul.f32 %v2558, 0.2
        %v2575 = vmul.f32 %v2559, 0.2
        %v2576 = vmul.f32 %v2560, 0.2
        %v2577 = vmul.f32 %v2561, 0.2
        %v2578 = vmul.f32 %v2562, 0.2
        %v2579 = vsel %vm2563, %v2555, %v2571
        %v2580 = vsel %vm2564, %v2556, %v2572
        %v2581 = vsel %vm2565, %v2557, %v2573
        %v2582 = vsel %vm2566, %v2558, %v2574
        %v2583 = vsel %vm2567, %v2559, %v2575
        %v2584 = vsel %vm2568, %v2560, %v2576
        %v2585 = vsel %vm2569, %v2561, %v2577
        %v2586 = vsel %vm2570, %v2562, %v2578
        %2587 = vst [vmem:[%s240] sm:$0xff] %v2579
        %2588 = vst [vmem:[%s240 + $0x8] sm:$0xff] %v2580
        %2589 = vst [vmem:[%s240 + $0x10] sm:$0xff] %v2581
        %2590 = vst [vmem:[%s240 + $0x18] sm:$0xff] %v2582
        %2591 = vst [vmem:[%s240 + $0x20] sm:$0xff] %v2583
        %2592 = vst [vmem:[%s240 + $0x28] sm:$0xff] %v2584
        %2593 = vst [vmem:[%s240 + $0x30] sm:$0xff] %v2585
        %2594 = vst [vmem:[%s240 + $0x38] sm:$0xff] %v2586
        %s2595 = sand.u32 %s140, 1
        %s2596 = scalar_lea.sflag [#allocation4], %s2595
        %s2597 = sand.u32 %s140, 1
        %s2598 = smul.addr %s2597, 64
        %s2599 = scalar_lea.vmem [#allocation5], %s2598
        // Predicated region
        $region45: #{tpu_custom_call.1} parent=39 // pred_check
          %p2600 = pneg %p150
        $region46: #{tpu_custom_call.1} parent=39 // pred_check_branch
          %2602 = sbr.rel (%p2600) target = $region48
        $region47: #{tpu_custom_call.1} parent=39 // pred_region
          %s2604 = ssub.s32 1024, 1024
          %2605 = vsyncadd %s2596, %s2604
          %s2606 = smul.addr %s22, 8
          %s2607 = smul.addr %s2606, 128
          %s2608 = scalar_lea.hbm %s5, %s2607
          %s2610 = sshll.u32 %s2599, 4
          %s2611 = int_to_ptr.vmem [resolvable:$true] %s2610
          %2613 = dma.vmem_to_hbm [thread:$0]  %s2611, 1024, %s2608, %s2596
        $region48: #{tpu_custom_call.1} parent=39 // pred_fallthru
          _
      $region40: #{tpu_custom_call.1} parent=5 // pred_fallthru
        _
      %p2614 = scmp.le.s32.totalorder 2, %s17
      // Predicated region
      $region49: #{tpu_custom_call.1} parent=5 // pred_check
        %p2615 = pneg %p2614
      $region50: #{tpu_custom_call.1} parent=5 // pred_check_branch
        %2617 = sbr.rel (%p2615) target = $region52
      $region51: #{tpu_custom_call.1} parent=5 // pred_region
        %s2618 = ssub.s32 %s17, 2
        // Predicated region
        $region53: #{tpu_custom_call.1} parent=51 // pred_check
          %p2619 = pneg %p156
        $region54: #{tpu_custom_call.1} parent=51 // pred_check_branch
          %2621 = sbr.rel (%p2619) target = $region56
        $region55: #{tpu_custom_call.1} parent=51 // pred_region
          %s2622 = sand.u32 %s141, 1
          %s2623 = scalar_lea.sflag [#allocation4], %s2622
          %s2624 = sand.u32 %s141, 1
          %s2625 = smul.addr %s2624, 64
          %s2626 = scalar_lea.vmem [#allocation5], %s2625
          %2627 = dma.done %s2623, 1024
        $region56: #{tpu_custom_call.1} parent=51 // pred_fallthru
          _
      $region52: #{tpu_custom_call.1} parent=5 // pred_fallthru
        _
    $region6: #{tpu_custom_call.1} parent=1 // loop_footer
      %s21 = sadd.s32 1, %s17
    $region7: #{tpu_custom_call.1} parent=1 // loop_footer_branch
      %16 = sbr.rel target = $region3
    $region8: #{tpu_custom_call.1} parent=1 // loop_exit
      _
    %2628 = vsyncpa [#allocation3], 1
    %s2629 = scalar_lea.sflag [#allocation3], 1
    %2630 = vsyncpa %s2629, 1
    %2631 = vsyncpa [#allocation4], 1
    %s2632 = scalar_lea.sflag [#allocation4], 1
    %2633 = vsyncpa %s2632, 1

</llo_original>
